<compile_context>
chip_gen: v7x
topology: tpu7x:2x2x1
jax: 0.10.0
libtpu: 0.0.40
codegen_flags: <defaults>
</compile_context>

<pallas_src>
import functools

import jax
import jax.numpy as jnp
from jax import lax
from jax.experimental import pallas as pl
from jax.experimental.pallas import tpu as pltpu

IGNORE_ID = 0
NEG = -1e30        # "minus infinity" that stays NaN-free in f32 arithmetic
LANES = 128        # extended CTC label axis padded to one lane-width


# --------------------------------------------------------------------------- #
# Small sizing helpers                                                        #
# --------------------------------------------------------------------------- #
def _vmem_limit_bytes(frac=0.75, cap=100 * 1024 * 1024):
    """~96 MiB on v5e/v6e (128 MiB physical), ~48 MiB on v7x (64 MiB)."""
    try:
        vmem = int(pltpu.get_tpu_info().vmem_capacity_bytes)
    except Exception:
        vmem = 128 * 1024 * 1024
    return int(min(vmem * frac, cap))


def _choose_pack(batch):
    # Bigger packs hide EUP/XLU latency of the serial alpha recursion, but keep
    # >= 2 packs so the "parallel" grid axis can use both v7x TensorCores.
    for pack in (32, 16, 8):
        if batch >= 2 * pack:
            return pack
    return 8


def _choose_chunk_t(T, pack, C, itemsize, target_bytes=2 * 1024 * 1024):
    # ~2 MiB log-prob blocks per grid step; bounded so the emission scratch
    # (chunk_t * pack * 512 B) stays small on v7x's 64 MiB VMEM.
    t_cap = ((T + 7) // 8) * 8
    ct = target_bytes // max(pack * C * itemsize, 1)
    ct = min(max(ct, 8), 512, t_cap)
    return int(max(8, (ct // 8) * 8))


# --------------------------------------------------------------------------- #
# CTC forward (alpha recursion in log space)                                  #
#   grid = (batch packs [parallel], T chunks [arbitrary, serial recursion])   #
# --------------------------------------------------------------------------- #
def _ctc_kernel(tmax_ref, lp_ref, ext_ref, skip_ref, ilen_ref, tlen_ref,
                out_ref, e_ref, alpha_ref):
    g = pl.program_id(0)
    tc = pl.program_id(1)
    chunk_t, pack, lanes = e_ref.shape
    C = lp_ref.shape[-1]

    ext = ext_ref[...]                                   # (pack, 128) int32
    skip = skip_ref[...]                                 # (pack, 128) f32
    ilen = ilen_ref[...]                                 # (pack, 1) int32
    tlen = tlen_ref[...]                                 # (pack, 1) int32
    lane = lax.broadcasted_iota(jnp.int32, (pack, lanes), 1)

    t_base = tc * chunk_t
    tmax = tmax_ref[g]                                   # max input len of this pack
    hi = jnp.clip(tmax - t_base, 0, chunk_t).astype(jnp.int32)

    # ---- Emission gather for this T-chunk: E[t, b, l] = lp[t_base+t, b, ext[b, l]]
    # One in-kernel one-hot MXU matmul per sample; results are stored timestep-
    # major (sample = sublane), so the recursion reads one contiguous tile per t.
    # bf16 operands are used only when the log-probs are already bf16 (exact 0/1
    # one-hot); f32 inputs keep the f32 path (important on v5e).
    gather_dtype = jnp.bfloat16 if lp_ref.dtype == jnp.bfloat16 else jnp.float32

    @pl.when(hi > 0)
    def _gather():
        cls_iota = lax.broadcasted_iota(jnp.int32, (C, lanes), 0)
        for b in range(pack):
            oh_b = (cls_iota == ext[b:b + 1, :]).astype(gather_dtype)   # (C, 128)
            lp_b = lp_ref[:, b, :].astype(gather_dtype)                 # (chunk_t, C)
            e_ref[:, b, :] = jnp.dot(lp_b, oh_b,
                                     preferred_element_type=jnp.float32)

    # ---- alpha init: only s=0 (blank) and s=1 (first symbol) are reachable ----
    @pl.when(tc == 0)
    def _init():
        alpha_ref[...] = jnp.where(lane < 2, e_ref[0], NEG)

    # ---- alpha recursion over this chunk's valid timesteps ----
    ge1 = lane >= 1
    ge2 = lane >= 2
    skip_ok = skip > 0.5

    def body(tl, alpha):
        e_t = e_ref[tl]                                                 # (pack, 128)
        a1 = jnp.where(ge1, pltpu.roll(alpha, shift=1, axis=1), NEG)
        a2 = jnp.where(ge2, pltpu.roll(alpha, shift=2, axis=1), NEG)
        a2 = jnp.where(skip_ok, a2, NEG)
        m = jnp.maximum(jnp.maximum(alpha, a1), a2)
        s = jnp.exp(alpha - m) + jnp.exp(a1 - m) + jnp.exp(a2 - m)
        new = m + jnp.log(s) + e_t
        # freeze a sample once its own input length is exhausted
        return jnp.where(t_base + tl < ilen, new, alpha)

    t_lo = jnp.where(tc == 0, jnp.int32(1), jnp.int32(0))
    alpha_ref[...] = lax.fori_loop(t_lo, hi, body, alpha_ref[...])

    # ---- finalize: -log( alpha[2*S] + alpha[2*S - 1] ) per sample ----
    @pl.when(tc == pl.num_programs(1) - 1)
    def _finalize():
        alpha = alpha_ref[...]
        idx_last = 2 * tlen                                             # (pack, 1)
        a_last = jnp.max(jnp.where(lane == idx_last, alpha, NEG),
                         axis=-1, keepdims=True)
        a_prev = jnp.max(jnp.where(lane == (idx_last - 1), alpha, NEG),
                         axis=-1, keepdims=True)
        m = jnp.maximum(a_last, a_prev)
        nll = -(m + jnp.log(jnp.exp(a_last - m) + jnp.exp(a_prev - m)))
        nll = jnp.where(nll > 1e20, 0.0, nll)                           # zero_infinity
        nll = nll / jnp.maximum(tlen, 1).astype(jnp.float32)            # 'mean': /target_len
        out_ref[...] = nll + jnp.zeros_like(out_ref)                    # lane-dense write


def ctc_loss_pallas(encoder_log_probs, encoder_output_lens, target, target_lens,
                    blank_id=0):
    T, B, C = encoder_log_probs.shape
    S = target.shape[1]
    L = 2 * S + 1
    assert L <= LANES, "extended CTC label length must fit in 128 lanes"

    pack = _choose_pack(B)
    num_packs = (B + pack - 1) // pack
    B_pad = num_packs * pack
    chunk_t = _choose_chunk_t(T, pack, C, encoder_log_probs.dtype.itemsize)
    num_t_chunks = (T + chunk_t - 1) // chunk_t

    # Only the tiny per-sample arrays are padded; the big (T, B, C) log-prob
    # tensor stays untouched in HBM (ragged B / T tails handled in-kernel —
    # padded samples occupy their own sublanes, so garbage never leaks).
    if B_pad != B:
        target = jnp.pad(target, ((0, B_pad - B), (0, 0)),
                         constant_values=blank_id)
        target_lens = jnp.pad(target_lens, ((0, B_pad - B),),
                              constant_values=1)
        encoder_output_lens = jnp.pad(encoder_output_lens, ((0, B_pad - B),),
                                      constant_values=1)

    ilen = jnp.clip(encoder_output_lens.astype(jnp.int32), 1, T)      # (B_pad,)
    tlen = target_lens.astype(jnp.int32)                              # (B_pad,)

    # ---- glue: extended labels [blank,y1,blank,y2,...] + skip mask (small) ----
    s_idx = jnp.arange(L)
    is_odd = (s_idx % 2) == 1
    tgt_pos = jnp.clip((s_idx - 1) // 2, 0, S - 1)
    ext = jnp.where(is_odd[None, :], target[:, tgt_pos], blank_id)
    ext = jnp.where(
        is_odd[None, :] & (((s_idx - 1) // 2)[None, :] < tlen[:, None]),
        ext, blank_id)                                                # (B_pad, L)
    ext_m2 = jnp.pad(ext, ((0, 0), (2, 0)), constant_values=blank_id)[:, :L]
    skip = (ext != blank_id) & (ext != ext_m2)

    ext_p = jnp.pad(ext, ((0, 0), (0, LANES - L)),
                    constant_values=blank_id).astype(jnp.int32)       # (B_pad, 128)
    skip_p = jnp.pad(skip, ((0, 0), (0, LANES - L))).astype(jnp.float32)

    pack_tmax = jnp.max(ilen.reshape(num_packs, pack), axis=1).astype(jnp.int32)

    # TODO(synk): overlap the next chunk's emission gather with the current
    # chunk's recursion via a double-buffered e_ref (manual DMA / emit_pipeline).
    out = pl.pallas_call(
        _ctc_kernel,
        out_shape=jax.ShapeDtypeStruct((B_pad, LANES), jnp.float32),
        grid_spec=pltpu.PrefetchScalarGridSpec(
            num_scalar_prefetch=1,
            grid=(num_packs, num_t_chunks),
            in_specs=[
                # native (T, B, C) layout, streamed in T-chunks
                pl.BlockSpec((chunk_t, pack, C), lambda g, t, tmax: (t, g, 0)),
                pl.BlockSpec((pack, LANES), lambda g, t, tmax: (g, 0)),   # ext labels
                pl.BlockSpec((pack, LANES), lambda g, t, tmax: (g, 0)),   # skip mask
                pl.BlockSpec((pack, 1), lambda g, t, tmax: (g, 0)),       # input lens
                pl.BlockSpec((pack, 1), lambda g, t, tmax: (g, 0)),       # target lens
            ],
            out_specs=pl.BlockSpec((pack, LANES), lambda g, t, tmax: (g, 0)),
            scratch_shapes=[
                pltpu.VMEM((chunk_t, pack, LANES), jnp.float32),  # emissions, t-major
                pltpu.VMEM((pack, LANES), jnp.float32),           # alpha carry
            ],
        ),
        compiler_params=pltpu.CompilerParams(
            dimension_semantics=("parallel", "arbitrary"),
            vmem_limit_bytes=_vmem_limit_bytes()),
    )(pack_tmax, encoder_log_probs, ext_p, skip_p,
      ilen.reshape(B_pad, 1), tlen.reshape(B_pad, 1))

    per_batch = out[:B, 0]
    return jnp.mean(per_batch)   # nn.CTCLoss reduction='mean' over the batch


# --------------------------------------------------------------------------- #
# Label-smoothed cross-entropy (architecture='transformer' -> log_softmax)    #
# --------------------------------------------------------------------------- #
def _ce_kernel(x_ref, tgt_ref, out_ref, *, smoothing, num_classes, total_rows):
    i = pl.program_id(0)
    x = x_ref[...].astype(jnp.float32)       # (TR, C) logits, upcast in-register
    tgt = tgt_ref[...]                       # (TR, 1) int32 targets
    TR, C = x.shape

    # log_softmax pieces (logp never materialized full-width)
    m = jnp.max(x, axis=-1, keepdims=True)
    z = x - m
    lse = jnp.log(jnp.sum(jnp.exp(z), axis=-1, keepdims=True))        # (TR, 1)

    cls = lax.broadcasted_iota(jnp.int32, (TR, C), 1)
    z_t = jnp.sum(jnp.where(cls == tgt, z, 0.0), axis=-1, keepdims=True)   # (TR, 1)
    z_sum = jnp.sum(z, axis=-1, keepdims=True)                             # (TR, 1)

    smooth_val = smoothing / (num_classes - 1)
    conf = 1.0 - smoothing
    # sum_c label_smoothed[c] * logp[c]  per row
    row = smooth_val * (z_sum - C * lse) + (conf - smooth_val) * (z_t - lse)

    # mask ignore_id rows AND the ragged last tile (no HBM padding of logits)
    row_idx = i * TR + lax.broadcasted_iota(jnp.int32, (TR, 1), 0)
    valid = (tgt != IGNORE_ID) & (row_idx < total_rows)
    partial = jnp.sum(jnp.where(valid, -row, 0.0))

    out_ref[...] = partial + jnp.zeros_like(out_ref)      # per-tile lane-dense partial


def label_smoothed_ce_pallas(logits, targets, num_classes, smoothing=0.1):
    R, C = logits.shape
    # ~2 MiB input blocks (mem-bound kernel; tile size scaled with C)
    row_tile = (2 * 1024 * 1024) // max(C * logits.dtype.itemsize, 1)
    row_tile = max(256, min(1024, (row_tile // 8) * 8))
    num_tiles = (R + row_tile - 1) // row_tile

    kern = functools.partial(_ce_kernel, smoothing=smoothing,
                             num_classes=num_classes, total_rows=R)
    out = pl.pallas_call(
        kern,
        out_shape=jax.ShapeDtypeStruct((num_tiles, 8, 128), jnp.float32),
        grid=(num_tiles,),
        in_specs=[
            pl.BlockSpec((row_tile, C), lambda i: (i, 0)),
            pl.BlockSpec((row_tile, 1), lambda i: (i, 0)),
        ],
        out_specs=pl.BlockSpec((1, 8, 128), lambda i: (i, 0, 0)),
        compiler_params=pltpu.CompilerParams(
            dimension_semantics=("parallel",),
            vmem_limit_bytes=_vmem_limit_bytes()),
    )(logits, targets.reshape(R, 1).astype(jnp.int32))

    # torch.mean over the full (R, C) smoothed-target * logp matrix
    return jnp.sum(out[:, 0, 0]) / float(R * C)


# --------------------------------------------------------------------------- #
# Joint loss wrapper (matches Joint_CTC_CrossEntropy_Loss.forward)            #
# --------------------------------------------------------------------------- #
def joint_ctc_ce_loss(encoder_log_probs, encoder_output_lens, output_softmax,
                      target, target_lens, *, num_classes, ctc_weight=0.5,
                      smoothing=0.1, blank_id=0):
    C = output_softmax.shape[-1]
    ctc = ctc_loss_pallas(encoder_log_probs, encoder_output_lens, target,
                          target_lens, blank_id=blank_id)
    dec_logits = output_softmax.reshape(-1, C)                 # .view(-1, C)
    ce = label_smoothed_ce_pallas(dec_logits, target.reshape(-1),
                                  num_classes=num_classes, smoothing=smoothing)
    loss = ctc_weight * ctc + (1.0 - ctc_weight) * ce
    return loss, ctc, ce


if __name__ == "__main__":
    B, T, S, C = 2, 16, 8, 32
    key = jax.random.PRNGKey(0)
    k1, k2, k3 = jax.random.split(key, 3)

    enc_logits = jax.random.normal(k1, (T, B, C), dtype=jnp.float32)
    encoder_log_probs = jax.nn.log_softmax(enc_logits, axis=-1)      # (T, B, C)
    encoder_output_lens = jnp.array([16, 12], dtype=jnp.int32)       # (B,)

    output_softmax = jax.random.normal(k2, (B, S, C), dtype=jnp.float32)  # (B, S, C)
    target_lens = jnp.array([8, 6], dtype=jnp.int32)                 # (B,)
    target = jax.random.randint(k3, (B, S), 1, C, dtype=jnp.int32)   # labels in [1, C)
    target = jnp.where(jnp.arange(S)[None, :] < target_lens[:, None], target, 0)

    loss, ctc_loss, ce_loss = joint_ctc_ce_loss(
        encoder_log_probs, encoder_output_lens, output_softmax, target, target_lens,
        num_classes=C, ctc_weight=0.5, smoothing=0.1)
    jax.block_until_ready((loss, ctc_loss, ce_loss))
    print("KERNEL_OK")
</pallas_src>

<mosaic_0001>
module attributes {stable_mosaic.version = 11 : i64} {
  func.func @_ctc_kernel(%arg0: i32, %arg1: i32, %arg2: memref<1xi32, #tpu.memory_space<smem>>, %arg3: memref<16x8x32xf32, #tpu.memory_space<vmem>>, %arg4: memref<8x128xi32, #tpu.memory_space<vmem>>, %arg5: memref<8x128xf32, #tpu.memory_space<vmem>>, %arg6: memref<8x1xi32, #tpu.memory_space<vmem>>, %arg7: memref<8x1xi32, #tpu.memory_space<vmem>>, %arg8: memref<8x128xf32, #tpu.memory_space<vmem>>, %arg9: memref<16x8x128xf32, #tpu.memory_space<vmem>>, %arg10: memref<8x128xf32, #tpu.memory_space<vmem>>) attributes {dimension_semantics = [#tpu.dimension_semantics<parallel>, #tpu.dimension_semantics<arbitrary>], iteration_bounds = array<i64: 1, 1>, scalar_prefetch = 1 : i64, scratch_operands = 2 : i64, tpu.core_type = #tpu.core_type<tc>, window_params = [{transform_indices = @transform_0, window_bounds = array<i64: 16, 8, 32>}, {transform_indices = @transform_1, window_bounds = array<i64: 8, 128>}, {transform_indices = @transform_2, window_bounds = array<i64: 8, 128>}, {transform_indices = @transform_3, window_bounds = array<i64: 8, 1>}, {transform_indices = @transform_4, window_bounds = array<i64: 8, 1>}, {transform_indices = @transform_5, window_bounds = array<i64: 8, 128>}]} {
    %c0 = arith.constant 0 : index
    %c0_0 = arith.constant 0 : index
    %0 = vector.load %arg4[%c0, %c0_0] : memref<8x128xi32, #tpu.memory_space<vmem>>, vector<8x128xi32>
    %c0_1 = arith.constant 0 : index
    %c0_2 = arith.constant 0 : index
    %1 = vector.load %arg5[%c0_1, %c0_2] : memref<8x128xf32, #tpu.memory_space<vmem>>, vector<8x128xf32>
    %c0_3 = arith.constant 0 : index
    %c0_4 = arith.constant 0 : index
    %2 = vector.load %arg6[%c0_3, %c0_4] : memref<8x1xi32, #tpu.memory_space<vmem>>, vector<8x1xi32>
    %c0_5 = arith.constant 0 : index
    %c0_6 = arith.constant 0 : index
    %3 = vector.load %arg7[%c0_5, %c0_6] : memref<8x1xi32, #tpu.memory_space<vmem>>, vector<8x1xi32>
    %4 = tpu.iota {dimensions = array<i32: 1>} : vector<8x128xi32>
    %c16_i32 = arith.constant 16 : i32
    %5 = arith.muli %arg1, %c16_i32 : i32
    %6 = arith.index_cast %arg0 : i32 to index
    %7 = memref.load %arg2[%6] : memref<1xi32, #tpu.memory_space<smem>>
    %8 = arith.subi %7, %5 : i32
    %c0_i32 = arith.constant 0 : i32
    %c16_i32_7 = arith.constant 16 : i32
    %9 = arith.maxsi %c0_i32, %8 : i32
    %10 = arith.minsi %c16_i32_7, %9 : i32
    %c0_i32_8 = arith.constant 0 : i32
    %11 = arith.cmpi sgt, %10, %c0_i32_8 : i32
    %12 = arith.extui %11 : i1 to i32
    %c0_i32_9 = arith.constant 0 : i32
    %13 = arith.cmpi ne, %12, %c0_i32_9 : i32
    scf.if %13 {
      %33 = tpu.iota {dimensions = array<i32: 0>} : vector<32x128xi32>
      %34 = vector.extract_strided_slice %0 {offsets = [0, 0], sizes = [1, 128], strides = [1, 1]} : vector<8x128xi32> to vector<1x128xi32>
      %35 = vector.broadcast %34 : vector<1x128xi32> to vector<32x128xi32>
      %36 = arith.cmpi eq, %33, %35 : vector<32x128xi32>
      %37 = arith.extui %36 : vector<32x128xi1> to vector<32x128xi32>
      %38 = arith.sitofp %37 : vector<32x128xi32> to vector<32x128xf32>
      %c0_22 = arith.constant 0 : index
      %c0_23 = arith.constant 0 : index
      %c0_24 = arith.constant 0 : index
      %39 = vector.load %arg3[%c0_22, %c0_23, %c0_24] : memref<16x8x32xf32, #tpu.memory_space<vmem>>, vector<16x1x32xf32>
      %40 = vector.shape_cast %39 : vector<16x1x32xf32> to vector<16x32xf32>
      %cst_25 = arith.constant dense<0.000000e+00> : vector<16x128xf32>
      %41 = tpu.matmul %40, %38, %cst_25 {dimension_numbers = #tpu.dot_dimension_numbers<[1], [0], [0], [1], [0, 0, 1, 1], [], []>} : vector<16x32xf32>, vector<32x128xf32>, vector<16x128xf32> -> vector<16x128xf32>
      %c0_26 = arith.constant 0 : index
      %c0_27 = arith.constant 0 : index
      %c0_28 = arith.constant 0 : index
      %42 = vector.load %arg9[%c0_26, %c0_27, %c0_28] : memref<16x8x128xf32, #tpu.memory_space<vmem>>, vector<16x1x128xf32>
      %43 = vector.shape_cast %42 : vector<16x1x128xf32> to vector<16x128xf32>
      %44 = vector.shape_cast %41 : vector<16x128xf32> to vector<16x1x128xf32>
      tpu.vector_store %arg9[%c0_26, %c0_27, %c0_28], %44 {strides = array<i32>} : memref<16x8x128xf32, #tpu.memory_space<vmem>>, vector<16x1x128xf32>,
      %45 = vector.extract_strided_slice %0 {offsets = [1, 0], sizes = [1, 128], strides = [1, 1]} : vector<8x128xi32> to vector<1x128xi32>
      %46 = vector.broadcast %45 : vector<1x128xi32> to vector<32x128xi32>
      %47 = arith.cmpi eq, %33, %46 : vector<32x128xi32>
      %48 = arith.extui %47 : vector<32x128xi1> to vector<32x128xi32>
      %49 = arith.sitofp %48 : vector<32x128xi32> to vector<32x128xf32>
      %c0_29 = arith.constant 0 : index
      %c1 = arith.constant 1 : index
      %c0_30 = arith.constant 0 : index
      %50 = vector.load %arg3[%c0_29, %c1, %c0_30] : memref<16x8x32xf32, #tpu.memory_space<vmem>>, vector<16x1x32xf32>
      %51 = vector.shape_cast %50 : vector<16x1x32xf32> to vector<16x32xf32>
      %cst_31 = arith.constant dense<0.000000e+00> : vector<16x128xf32>
      %52 = tpu.matmul %51, %49, %cst_31 {dimension_numbers = #tpu.dot_dimension_numbers<[1], [0], [0], [1], [0, 0, 1, 1], [], []>} : vector<16x32xf32>, vector<32x128xf32>, vector<16x128xf32> -> vector<16x128xf32>
      %c0_32 = arith.constant 0 : index
      %c1_33 = arith.constant 1 : index
      %c0_34 = arith.constant 0 : index
      %53 = vector.load %arg9[%c0_32, %c1_33, %c0_34] : memref<16x8x128xf32, #tpu.memory_space<vmem>>, vector<16x1x128xf32>
      %54 = vector.shape_cast %53 : vector<16x1x128xf32> to vector<16x128xf32>
      %55 = vector.shape_cast %52 : vector<16x128xf32> to vector<16x1x128xf32>
      tpu.vector_store %arg9[%c0_32, %c1_33, %c0_34], %55 {strides = array<i32>} : memref<16x8x128xf32, #tpu.memory_space<vmem>>, vector<16x1x128xf32>,
      %56 = vector.extract_strided_slice %0 {offsets = [2, 0], sizes = [1, 128], strides = [1, 1]} : vector<8x128xi32> to vector<1x128xi32>
      %57 = vector.broadcast %56 : vector<1x128xi32> to vector<32x128xi32>
      %58 = arith.cmpi eq, %33, %57 : vector<32x128xi32>
      %59 = arith.extui %58 : vector<32x128xi1> to vector<32x128xi32>
      %60 = arith.sitofp %59 : vector<32x128xi32> to vector<32x128xf32>
      %c0_35 = arith.constant 0 : index
      %c2 = arith.constant 2 : index
      %c0_36 = arith.constant 0 : index
      %61 = vector.load %arg3[%c0_35, %c2, %c0_36] : memref<16x8x32xf32, #tpu.memory_space<vmem>>, vector<16x1x32xf32>
      %62 = vector.shape_cast %61 : vector<16x1x32xf32> to vector<16x32xf32>
      %cst_37 = arith.constant dense<0.000000e+00> : vector<16x128xf32>
      %63 = tpu.matmul %62, %60, %cst_37 {dimension_numbers = #tpu.dot_dimension_numbers<[1], [0], [0], [1], [0, 0, 1, 1], [], []>} : vector<16x32xf32>, vector<32x128xf32>, vector<16x128xf32> -> vector<16x128xf32>
      %c0_38 = arith.constant 0 : index
      %c2_39 = arith.constant 2 : index
      %c0_40 = arith.constant 0 : index
      %64 = vector.load %arg9[%c0_38, %c2_39, %c0_40] : memref<16x8x128xf32, #tpu.memory_space<vmem>>, vector<16x1x128xf32>
      %65 = vector.shape_cast %64 : vector<16x1x128xf32> to vector<16x128xf32>
      %66 = vector.shape_cast %63 : vector<16x128xf32> to vector<16x1x128xf32>
      tpu.vector_store %arg9[%c0_38, %c2_39, %c0_40], %66 {strides = array<i32>} : memref<16x8x128xf32, #tpu.memory_space<vmem>>, vector<16x1x128xf32>,
      %67 = vector.extract_strided_slice %0 {offsets = [3, 0], sizes = [1, 128], strides = [1, 1]} : vector<8x128xi32> to vector<1x128xi32>
      %68 = vector.broadcast %67 : vector<1x128xi32> to vector<32x128xi32>
      %69 = arith.cmpi eq, %33, %68 : vector<32x128xi32>
      %70 = arith.extui %69 : vector<32x128xi1> to vector<32x128xi32>
      %71 = arith.sitofp %70 : vector<32x128xi32> to vector<32x128xf32>
      %c0_41 = arith.constant 0 : index
      %c3 = arith.constant 3 : index
      %c0_42 = arith.constant 0 : index
      %72 = vector.load %arg3[%c0_41, %c3, %c0_42] : memref<16x8x32xf32, #tpu.memory_space<vmem>>, vector<16x1x32xf32>
      %73 = vector.shape_cast %72 : vector<16x1x32xf32> to vector<16x32xf32>
      %cst_43 = arith.constant dense<0.000000e+00> : vector<16x128xf32>
      %74 = tpu.matmul %73, %71, %cst_43 {dimension_numbers = #tpu.dot_dimension_numbers<[1], [0], [0], [1], [0, 0, 1, 1], [], []>} : vector<16x32xf32>, vector<32x128xf32>, vector<16x128xf32> -> vector<16x128xf32>
      %c0_44 = arith.constant 0 : index
      %c3_45 = arith.constant 3 : index
      %c0_46 = arith.constant 0 : index
      %75 = vector.load %arg9[%c0_44, %c3_45, %c0_46] : memref<16x8x128xf32, #tpu.memory_space<vmem>>, vector<16x1x128xf32>
      %76 = vector.shape_cast %75 : vector<16x1x128xf32> to vector<16x128xf32>
      %77 = vector.shape_cast %74 : vector<16x128xf32> to vector<16x1x128xf32>
      tpu.vector_store %arg9[%c0_44, %c3_45, %c0_46], %77 {strides = array<i32>} : memref<16x8x128xf32, #tpu.memory_space<vmem>>, vector<16x1x128xf32>,
      %78 = vector.extract_strided_slice %0 {offsets = [4, 0], sizes = [1, 128], strides = [1, 1]} : vector<8x128xi32> to vector<1x128xi32>
      %79 = vector.broadcast %78 : vector<1x128xi32> to vector<32x128xi32>
      %80 = arith.cmpi eq, %33, %79 : vector<32x128xi32>
      %81 = arith.extui %80 : vector<32x128xi1> to vector<32x128xi32>
      %82 = arith.sitofp %81 : vector<32x128xi32> to vector<32x128xf32>
      %c0_47 = arith.constant 0 : index
      %c4 = arith.constant 4 : index
      %c0_48 = arith.constant 0 : index
      %83 = vector.load %arg3[%c0_47, %c4, %c0_48] : memref<16x8x32xf32, #tpu.memory_space<vmem>>, vector<16x1x32xf32>
      %84 = vector.shape_cast %83 : vector<16x1x32xf32> to vector<16x32xf32>
      %cst_49 = arith.constant dense<0.000000e+00> : vector<16x128xf32>
      %85 = tpu.matmul %84, %82, %cst_49 {dimension_numbers = #tpu.dot_dimension_numbers<[1], [0], [0], [1], [0, 0, 1, 1], [], []>} : vector<16x32xf32>, vector<32x128xf32>, vector<16x128xf32> -> vector<16x128xf32>
      %c0_50 = arith.constant 0 : index
      %c4_51 = arith.constant 4 : index
      %c0_52 = arith.constant 0 : index
      %86 = vector.load %arg9[%c0_50, %c4_51, %c0_52] : memref<16x8x128xf32, #tpu.memory_space<vmem>>, vector<16x1x128xf32>
      %87 = vector.shape_cast %86 : vector<16x1x128xf32> to vector<16x128xf32>
      %88 = vector.shape_cast %85 : vector<16x128xf32> to vector<16x1x128xf32>
      tpu.vector_store %arg9[%c0_50, %c4_51, %c0_52], %88 {strides = array<i32>} : memref<16x8x128xf32, #tpu.memory_space<vmem>>, vector<16x1x128xf32>,
      %89 = vector.extract_strided_slice %0 {offsets = [5, 0], sizes = [1, 128], strides = [1, 1]} : vector<8x128xi32> to vector<1x128xi32>
      %90 = vector.broadcast %89 : vector<1x128xi32> to vector<32x128xi32>
      %91 = arith.cmpi eq, %33, %90 : vector<32x128xi32>
      %92 = arith.extui %91 : vector<32x128xi1> to vector<32x128xi32>
      %93 = arith.sitofp %92 : vector<32x128xi32> to vector<32x128xf32>
      %c0_53 = arith.constant 0 : index
      %c5 = arith.constant 5 : index
      %c0_54 = arith.constant 0 : index
      %94 = vector.load %arg3[%c0_53, %c5, %c0_54] : memref<16x8x32xf32, #tpu.memory_space<vmem>>, vector<16x1x32xf32>
      %95 = vector.shape_cast %94 : vector<16x1x32xf32> to vector<16x32xf32>
      %cst_55 = arith.constant dense<0.000000e+00> : vector<16x128xf32>
      %96 = tpu.matmul %95, %93, %cst_55 {dimension_numbers = #tpu.dot_dimension_numbers<[1], [0], [0], [1], [0, 0, 1, 1], [], []>} : vector<16x32xf32>, vector<32x128xf32>, vector<16x128xf32> -> vector<16x128xf32>
      %c0_56 = arith.constant 0 : index
      %c5_57 = arith.constant 5 : index
      %c0_58 = arith.constant 0 : index
      %97 = vector.load %arg9[%c0_56, %c5_57, %c0_58] : memref<16x8x128xf32, #tpu.memory_space<vmem>>, vector<16x1x128xf32>
      %98 = vector.shape_cast %97 : vector<16x1x128xf32> to vector<16x128xf32>
      %99 = vector.shape_cast %96 : vector<16x128xf32> to vector<16x1x128xf32>
      tpu.vector_store %arg9[%c0_56, %c5_57, %c0_58], %99 {strides = array<i32>} : memref<16x8x128xf32, #tpu.memory_space<vmem>>, vector<16x1x128xf32>,
      %100 = vector.extract_strided_slice %0 {offsets = [6, 0], sizes = [1, 128], strides = [1, 1]} : vector<8x128xi32> to vector<1x128xi32>
      %101 = vector.broadcast %100 : vector<1x128xi32> to vector<32x128xi32>
      %102 = arith.cmpi eq, %33, %101 : vector<32x128xi32>
      %103 = arith.extui %102 : vector<32x128xi1> to vector<32x128xi32>
      %104 = arith.sitofp %103 : vector<32x128xi32> to vector<32x128xf32>
      %c0_59 = arith.constant 0 : index
      %c6 = arith.constant 6 : index
      %c0_60 = arith.constant 0 : index
      %105 = vector.load %arg3[%c0_59, %c6, %c0_60] : memref<16x8x32xf32, #tpu.memory_space<vmem>>, vector<16x1x32xf32>
      %106 = vector.shape_cast %105 : vector<16x1x32xf32> to vector<16x32xf32>
      %cst_61 = arith.constant dense<0.000000e+00> : vector<16x128xf32>
      %107 = tpu.matmul %106, %104, %cst_61 {dimension_numbers = #tpu.dot_dimension_numbers<[1], [0], [0], [1], [0, 0, 1, 1], [], []>} : vector<16x32xf32>, vector<32x128xf32>, vector<16x128xf32> -> vector<16x128xf32>
      %c0_62 = arith.constant 0 : index
      %c6_63 = arith.constant 6 : index
      %c0_64 = arith.constant 0 : index
      %108 = vector.load %arg9[%c0_62, %c6_63, %c0_64] : memref<16x8x128xf32, #tpu.memory_space<vmem>>, vector<16x1x128xf32>
      %109 = vector.shape_cast %108 : vector<16x1x128xf32> to vector<16x128xf32>
      %110 = vector.shape_cast %107 : vector<16x128xf32> to vector<16x1x128xf32>
      tpu.vector_store %arg9[%c0_62, %c6_63, %c0_64], %110 {strides = array<i32>} : memref<16x8x128xf32, #tpu.memory_space<vmem>>, vector<16x1x128xf32>,
      %111 = vector.extract_strided_slice %0 {offsets = [7, 0], sizes = [1, 128], strides = [1, 1]} : vector<8x128xi32> to vector<1x128xi32>
      %112 = vector.broadcast %111 : vector<1x128xi32> to vector<32x128xi32>
      %113 = arith.cmpi eq, %33, %112 : vector<32x128xi32>
      %114 = arith.extui %113 : vector<32x128xi1> to vector<32x128xi32>
      %115 = arith.sitofp %114 : vector<32x128xi32> to vector<32x128xf32>
      %c0_65 = arith.constant 0 : index
      %c7 = arith.constant 7 : index
      %c0_66 = arith.constant 0 : index
      %116 = vector.load %arg3[%c0_65, %c7, %c0_66] : memref<16x8x32xf32, #tpu.memory_space<vmem>>, vector<16x1x32xf32>
      %117 = vector.shape_cast %116 : vector<16x1x32xf32> to vector<16x32xf32>
      %cst_67 = arith.constant dense<0.000000e+00> : vector<16x128xf32>
      %118 = tpu.matmul %117, %115, %cst_67 {dimension_numbers = #tpu.dot_dimension_numbers<[1], [0], [0], [1], [0, 0, 1, 1], [], []>} : vector<16x32xf32>, vector<32x128xf32>, vector<16x128xf32> -> vector<16x128xf32>
      %c0_68 = arith.constant 0 : index
      %c7_69 = arith.constant 7 : index
      %c0_70 = arith.constant 0 : index
      %119 = vector.load %arg9[%c0_68, %c7_69, %c0_70] : memref<16x8x128xf32, #tpu.memory_space<vmem>>, vector<16x1x128xf32>
      %120 = vector.shape_cast %119 : vector<16x1x128xf32> to vector<16x128xf32>
      %121 = vector.shape_cast %118 : vector<16x128xf32> to vector<16x1x128xf32>
      tpu.vector_store %arg9[%c0_68, %c7_69, %c0_70], %121 {strides = array<i32>} : memref<16x8x128xf32, #tpu.memory_space<vmem>>, vector<16x1x128xf32>,
    } else {
    }
    %c0_i32_10 = arith.constant 0 : i32
    %14 = arith.cmpi eq, %arg1, %c0_i32_10 : i32
    %15 = arith.extui %14 : i1 to i32
    %c0_i32_11 = arith.constant 0 : i32
    %16 = arith.cmpi ne, %15, %c0_i32_11 : i32
    scf.if %16 {
      %c2_i32_22 = arith.constant 2 : i32
      %33 = vector.broadcast %c2_i32_22 : i32 to vector<8x128xi32>
      %34 = arith.cmpi slt, %4, %33 : vector<8x128xi32>
      %c0_23 = arith.constant 0 : index
      %c0_24 = arith.constant 0 : index
      %c0_25 = arith.constant 0 : index
      %35 = vector.load %arg9[%c0_23, %c0_24, %c0_25] : memref<16x8x128xf32, #tpu.memory_space<vmem>>, vector<1x8x128xf32>
      %36 = vector.shape_cast %35 : vector<1x8x128xf32> to vector<8x128xf32>
      %cst_26 = arith.constant -1.000000e+30 : f32
      %37 = vector.broadcast %cst_26 : f32 to vector<8x128xf32>
      %38 = arith.select %34, %36, %37 : vector<8x128xi1>, vector<8x128xf32>
      %c0_27 = arith.constant 0 : index
      %c0_28 = arith.constant 0 : index
      %39 = vector.load %arg10[%c0_27, %c0_28] : memref<8x128xf32, #tpu.memory_space<vmem>>, vector<8x128xf32>
      tpu.vector_store %arg10[%c0_27, %c0_28], %38 {strides = array<i32>} : memref<8x128xf32, #tpu.memory_space<vmem>>, vector<8x128xf32>,
    } else {
    }
    %c1_i32 = arith.constant 1 : i32
    %17 = vector.broadcast %c1_i32 : i32 to vector<8x128xi32>
    %18 = arith.cmpi sge, %4, %17 : vector<8x128xi32>
    %c2_i32 = arith.constant 2 : i32
    %19 = vector.broadcast %c2_i32 : i32 to vector<8x128xi32>
    %20 = arith.cmpi sge, %4, %19 : vector<8x128xi32>
    %cst = arith.constant 5.000000e-01 : f32
    %21 = vector.broadcast %cst : f32 to vector<8x128xf32>
    %22 = arith.cmpf ogt, %1, %21 : vector<8x128xf32>
    %c0_i32_12 = arith.constant 0 : i32
    %23 = arith.cmpi eq, %arg1, %c0_i32_12 : i32
    %c1_i32_13 = arith.constant 1 : i32
    %c0_i32_14 = arith.constant 0 : i32
    %24 = arith.select %23, %c1_i32_13, %c0_i32_14 : i32
    %c0_15 = arith.constant 0 : index
    %c0_16 = arith.constant 0 : index
    %25 = vector.load %arg10[%c0_15, %c0_16] : memref<8x128xf32, #tpu.memory_space<vmem>>, vector<8x128xf32>
    %26 = arith.subi %10, %24 : i32
    %27 = arith.addi %24, %26 : i32
    %c1_i32_17 = arith.constant 1 : i32
    %28 = scf.for %arg11 = %24 to %27 step %c1_i32_17 iter_args(%arg12 = %25) -> (vector<8x128xf32>)  : i32 {
      %33 = arith.index_cast %arg11 : i32 to index
      %c0_22 = arith.constant 0 : index
      %c0_23 = arith.constant 0 : index
      %34 = vector.load %arg9[%33, %c0_22, %c0_23] : memref<16x8x128xf32, #tpu.memory_space<vmem>>, vector<1x8x128xf32>
      %35 = vector.shape_cast %34 : vector<1x8x128xf32> to vector<8x128xf32>
      %c1_i32_24 = arith.constant 1 : i32
      %36 = tpu.dynamic_rotate %arg12 by %c1_i32_24 dim 1 : vector<8x128xf32>, i32 -> vector<8x128xf32>
      %cst_25 = arith.constant -1.000000e+30 : f32
      %37 = vector.broadcast %cst_25 : f32 to vector<8x128xf32>
      %38 = arith.select %18, %36, %37 : vector<8x128xi1>, vector<8x128xf32>
      %c2_i32_26 = arith.constant 2 : i32
      %39 = tpu.dynamic_rotate %arg12 by %c2_i32_26 dim 1 : vector<8x128xf32>, i32 -> vector<8x128xf32>
      %cst_27 = arith.constant -1.000000e+30 : f32
      %40 = vector.broadcast %cst_27 : f32 to vector<8x128xf32>
      %41 = arith.select %20, %39, %40 : vector<8x128xi1>, vector<8x128xf32>
      %cst_28 = arith.constant -1.000000e+30 : f32
      %42 = vector.broadcast %cst_28 : f32 to vector<8x128xf32>
      %43 = arith.select %22, %41, %42 : vector<8x128xi1>, vector<8x128xf32>
      %44 = arith.maximumf %arg12, %38 : vector<8x128xf32>
      %45 = arith.maximumf %44, %43 : vector<8x128xf32>
      %46 = arith.subf %arg12, %45 : vector<8x128xf32>
      %47 = math.exp %46 : vector<8x128xf32>
      %48 = arith.subf %38, %45 : vector<8x128xf32>
      %49 = math.exp %48 : vector<8x128xf32>
      %50 = arith.addf %47, %49 : vector<8x128xf32>
      %51 = arith.subf %43, %45 : vector<8x128xf32>
      %52 = math.exp %51 : vector<8x128xf32>
      %53 = arith.addf %50, %52 : vector<8x128xf32>
      %54 = math.log %53 : vector<8x128xf32>
      %55 = arith.addf %45, %54 : vector<8x128xf32>
      %56 = arith.addf %55, %35 : vector<8x128xf32>
      %57 = arith.addi %5, %arg11 : i32
      %58 = vector.broadcast %57 : i32 to vector<8x1xi32>
      %59 = arith.cmpi slt, %58, %2 : vector<8x1xi32>
      %60 = vector.shape_cast %59 : vector<8x1xi1> to vector<8x1xi1>
      %61 = vector.broadcast %60 : vector<8x1xi1> to vector<8x128xi1>
      %62 = arith.select %61, %56, %arg12 : vector<8x128xi1>, vector<8x128xf32>
      scf.yield %62 : vector<8x128xf32>
    }
    %c0_18 = arith.constant 0 : index
    %c0_19 = arith.constant 0 : index
    %29 = vector.load %arg10[%c0_18, %c0_19] : memref<8x128xf32, #tpu.memory_space<vmem>>, vector<8x128xf32>
    tpu.vector_store %arg10[%c0_18, %c0_19], %28 {strides = array<i32>} : memref<8x128xf32, #tpu.memory_space<vmem>>, vector<8x128xf32>,
    %c0_i32_20 = arith.constant 0 : i32
    %30 = arith.cmpi eq, %arg1, %c0_i32_20 : i32
    %31 = arith.extui %30 : i1 to i32
    %c0_i32_21 = arith.constant 0 : i32
    %32 = arith.cmpi ne, %31, %c0_i32_21 : i32
    scf.if %32 {
      %c0_22 = arith.constant 0 : index
      %c0_23 = arith.constant 0 : index
      %33 = vector.load %arg10[%c0_22, %c0_23] : memref<8x128xf32, #tpu.memory_space<vmem>>, vector<8x128xf32>
      %c2_i32_24 = arith.constant 2 : i32
      %34 = vector.broadcast %c2_i32_24 : i32 to vector<8x1xi32>
      %35 = arith.muli %34, %3 : vector<8x1xi32>
      %36 = vector.broadcast %35 : vector<8x1xi32> to vector<8x128xi32>
      %37 = arith.cmpi eq, %4, %36 : vector<8x128xi32>
      %cst_25 = arith.constant -1.000000e+30 : f32
      %38 = vector.broadcast %cst_25 : f32 to vector<8x128xf32>
      %39 = arith.select %37, %33, %38 : vector<8x128xi1>, vector<8x128xf32>
      %cst_26 = arith.constant dense<0xFF800000> : vector<8xf32>
      %40 = vector.multi_reduction <maximumf>, %39, %cst_26 [1] : vector<8x128xf32> to vector<8xf32>
      %41 = vector.shape_cast %40 : vector<8xf32> to vector<8x1xf32>
      %c1_i32_27 = arith.constant 1 : i32
      %42 = vector.broadcast %c1_i32_27 : i32 to vector<8x1xi32>
      %43 = arith.subi %35, %42 : vector<8x1xi32>
      %44 = vector.broadcast %43 : vector<8x1xi32> to vector<8x128xi32>
      %45 = arith.cmpi eq, %4, %44 : vector<8x128xi32>
      %cst_28 = arith.constant -1.000000e+30 : f32
      %46 = vector.broadcast %cst_28 : f32 to vector<8x128xf32>
      %47 = arith.select %45, %33, %46 : vector<8x128xi1>, vector<8x128xf32>
      %cst_29 = arith.constant dense<0xFF800000> : vector<8xf32>
      %48 = vector.multi_reduction <maximumf>, %47, %cst_29 [1] : vector<8x128xf32> to vector<8xf32>
      %49 = vector.shape_cast %48 : vector<8xf32> to vector<8x1xf32>
      %50 = arith.maximumf %41, %49 : vector<8x1xf32>
      %51 = arith.subf %41, %50 : vector<8x1xf32>
      %52 = math.exp %51 : vector<8x1xf32>
      %53 = arith.subf %49, %50 : vector<8x1xf32>
      %54 = math.exp %53 : vector<8x1xf32>
      %55 = arith.addf %52, %54 : vector<8x1xf32>
      %56 = math.log %55 : vector<8x1xf32>
      %57 = arith.addf %50, %56 : vector<8x1xf32>
      %cst_30 = arith.constant 0.000000e+00 : f32
      %58 = vector.broadcast %cst_30 : f32 to vector<8x1xf32>
      %59 = arith.subf %58, %57 : vector<8x1xf32>
      %cst_31 = arith.constant 1.000000e+20 : f32
      %60 = vector.broadcast %cst_31 : f32 to vector<8x1xf32>
      %61 = arith.cmpf ogt, %59, %60 : vector<8x1xf32>
      %cst_32 = arith.constant 0.000000e+00 : f32
      %62 = vector.broadcast %cst_32 : f32 to vector<8x1xf32>
      %63 = arith.select %61, %62, %59 : vector<8x1xi1>, vector<8x1xf32>
      %c1_i32_33 = arith.constant 1 : i32
      %64 = vector.broadcast %c1_i32_33 : i32 to vector<8x1xi32>
      %65 = arith.maxsi %3, %64 : vector<8x1xi32>
      %66 = arith.sitofp %65 : vector<8x1xi32> to vector<8x1xf32>
      %67 = arith.divf %63, %66 : vector<8x1xf32>
      %cst_34 = arith.constant 0.000000e+00 : f32
      %68 = vector.broadcast %cst_34 : f32 to vector<8x128xf32>
      %69 = vector.broadcast %67 : vector<8x1xf32> to vector<8x128xf32>
      %70 = arith.addf %69, %68 : vector<8x128xf32>
      %c0_35 = arith.constant 0 : index
      %c0_36 = arith.constant 0 : index
      %71 = vector.load %arg8[%c0_35, %c0_36] : memref<8x128xf32, #tpu.memory_space<vmem>>, vector<8x128xf32>
      tpu.vector_store %arg8[%c0_35, %c0_36], %70 {strides = array<i32>} : memref<8x128xf32, #tpu.memory_space<vmem>>, vector<8x128xf32>,
    } else {
    }
    return
  }
  func.func @transform_0(%arg0: i32, %arg1: i32, %arg2: memref<1xi32, #tpu.memory_space<smem>>) -> (i32, i32, i32) {
    %c0_i32 = arith.constant 0 : i32
    %c0_i32_0 = arith.constant 0 : i32
    return %arg1, %arg0, %c0_i32 : i32, i32, i32
  }
  func.func @transform_1(%arg0: i32, %arg1: i32, %arg2: memref<1xi32, #tpu.memory_space<smem>>) -> (i32, i32) {
    %c0_i32 = arith.constant 0 : i32
    %c0_i32_0 = arith.constant 0 : i32
    return %arg0, %c0_i32 : i32, i32
  }
  func.func @transform_2(%arg0: i32, %arg1: i32, %arg2: memref<1xi32, #tpu.memory_space<smem>>) -> (i32, i32) {
    %c0_i32 = arith.constant 0 : i32
    %c0_i32_0 = arith.constant 0 : i32
    return %arg0, %c0_i32 : i32, i32
  }
  func.func @transform_3(%arg0: i32, %arg1: i32, %arg2: memref<1xi32, #tpu.memory_space<smem>>) -> (i32, i32) {
    %c0_i32 = arith.constant 0 : i32
    %c0_i32_0 = arith.constant 0 : i32
    return %arg0, %c0_i32 : i32, i32
  }
  func.func @transform_4(%arg0: i32, %arg1: i32, %arg2: memref<1xi32, #tpu.memory_space<smem>>) -> (i32, i32) {
    %c0_i32 = arith.constant 0 : i32
    %c0_i32_0 = arith.constant 0 : i32
    return %arg0, %c0_i32 : i32, i32
  }
  func.func @transform_5(%arg0: i32, %arg1: i32, %arg2: memref<1xi32, #tpu.memory_space<smem>>) -> (i32, i32) {
    %c0_i32 = arith.constant 0 : i32
    %c0_i32_0 = arith.constant 0 : i32
    return %arg0, %c0_i32 : i32, i32
  }
}

</mosaic_0001>

<llo_original>
// kernel: tpu_custom_call.1
$region0: #{tpu_custom_call.1}
  #allocation0 [shape = 'u32[]', space=smem, size = 0x4, offset = 0x4, fixed_abs, tag = 'smem constant byte address 0x4 - core index']
  #allocation1 [shape = 'u32[144,128]{1,0:T(1,128)}', space=vmem, size = 0x12000, scoped, tag = 'internal scratch']
  #allocation2 [shape = 'f32[16,8,128]{2,1,0:T(8,128)}', space=vmem, size = 0x10000, scoped, tag = 'scratch operand']
  #allocation3 [shape = 'f32[8,128]{1,0:T(8,128)}', space=vmem, size = 0x1000, scoped, tag = 'scratch operand']
  #allocation4 [shape = 's32[1]{0}', space=sflag, size = 0x4, scoped, tag = 'scoped memory for tpu_custom_call.1']
  #allocation5 [shape = 's32[1]{0:T(128)S(6)}', space=smem, size = 0x200, scoped, tag = 'prefetched SMEM operand 0']
  #allocation16 [shape = 's32[]', space=sflag, size = 0x4, offset = 0, fixed_abs, tag = 'sflag constant byte address 0x0 - dummy sync flag']
  %s0 = inlined_call_operand.<no memory space> [shape: s32[1], index: 0, kind: input, shape index: {}]
  %s1 = inlined_call_operand.hbm [shape: f32[16,2,32], index: 1, kind: input, shape index: {}]
  %s2 = inlined_call_operand.hbm [shape: s32[8,128], index: 2, kind: input, shape index: {}]
  %s3 = inlined_call_operand.hbm [shape: f32[8,128], index: 3, kind: input, shape index: {}]
  %s4 = inlined_call_operand.hbm [shape: s32[8,1], index: 4, kind: input, shape index: {}]
  %s5 = inlined_call_operand.hbm [shape: s32[8,1], index: 5, kind: input, shape index: {}]
  %s6 = inlined_call_operand.hbm [shape: f32[8,128], index: 6, kind: output, shape index: {}]
  %s7 = sld [smem:[#allocation0]]
  $region69: #{tpu_custom_call.1} parent=0
    _
  %s9 = ssub.s32 1, %s7
  %s10 = scalar_select 0, %s9, %s7
  %11 = sst [smem:[#allocation5]] %s0
  $region1: #{tpu_custom_call.1} parent=0
    #allocation6 [shape = 'u8[65536]{0}', space=vmem, size = 0x10000, scoped, tag = 'input window, operand 1, single buffered']
    #allocation7 [shape = 's32[1]{0}', space=sflag, size = 0x4, scoped, tag = 'scoped memory for tpu_custom_call.1']
    #allocation8 [shape = 's32[1]{0}', space=sflag, size = 0x4, scoped, tag = 'scoped memory for tpu_custom_call.1']
    #allocation9 [shape = 'u8[4096]{0}', space=vmem, size = 0x1000, scoped, tag = 'input window, operand 2, single buffered']
    #allocation10 [shape = 's32[1]{0}', space=sflag, size = 0x4, scoped, tag = 'scoped memory for tpu_custom_call.1']
    #allocation11 [shape = 'u8[4096]{0}', space=vmem, size = 0x1000, scoped, tag = 'input window, operand 3, single buffered']
    #allocation12 [shape = 'u8[4096]{0}', space=vmem, size = 0x1000, scoped, tag = 'input window, operand 4, single buffered']
    #allocation13 [shape = 's32[1]{0}', space=sflag, size = 0x4, scoped, tag = 'scoped memory for tpu_custom_call.1']
    #allocation14 [shape = 'u8[4096]{0}', space=vmem, size = 0x1000, scoped, tag = 'input window, operand 5, single buffered']
    #allocation15 [shape = 'u8[4096]{0}', space=vmem, size = 0x1000, scoped, tag = 'output window, operand 0, single buffered']
    %12 = vsyncpa [#allocation7], 0
    %13 = vsyncpa [#allocation10], 0
    %14 = vsyncpa [#allocation13], 0
    %15 = vsyncpa [#allocation8], 0
    // Predicated region
    $region2: #{tpu_custom_call.1} parent=1 // pred_check
      _
    $region3: #{tpu_custom_call.1} parent=1 // pred_check_branch
      %17 = sbr.rel (0) target = $region5
    $region4: #{tpu_custom_call.1} parent=1 // pred_region
      #allocation17 [shape = 'u32[6]{0}', space=smem, size = 0x18, scoped, tag = 'DMA stride descriptor']
      %s19 = ssub.s32 2048, 512
      %20 = vsyncadd [#allocation7], %s19
      %s22 = sshll.u32 1, 14
      %s23 = sxor.u32 4294967295, %s22
      %s25 = sld [smem:[#allocation0]]
      %s26 = sadd.s32 2, %s25
      %s28 = sshll.u32 7, 26
      %s29 = sxor.u32 4294967295, %s28
      %s30 = sand.u32 0, %s29
      %s31 = sshll.u32 %s26, 26
      %s32 = sor.u32 %s30, %s31
      %s33 = sshll.u32 [#allocation6], 4
      %s34 = int_to_ptr.vmem [resolvable:$true] %s33
      %40 = sst [smem:[#allocation17]] 32
      %s41 = scalar_lea.smem [#allocation17], 1
      %42 = sst [smem:[%s41]] 128
      %s43 = scalar_lea.smem [#allocation17], 2
      %44 = sst [smem:[%s43]] 1
      %s45 = scalar_lea.smem [#allocation17], 3
      %46 = sst [smem:[%s45]] 32
      %s47 = scalar_lea.smem [#allocation17], 4
      %48 = sst [smem:[%s47]] 32
      %s49 = scalar_lea.smem [#allocation17], 5
      %50 = sst [smem:[%s49]] 2
      %52 = dma.general %s1, 512, %s34, [#allocation7], [#allocation16], [#allocation17], %s32, 0
    $region5: #{tpu_custom_call.1} parent=1 // pred_fallthru
      _
    // Predicated region
    $region6: #{tpu_custom_call.1} parent=1 // pred_check
      _
    $region7: #{tpu_custom_call.1} parent=1 // pred_check_branch
      %54 = sbr.rel (0) target = $region9
    $region8: #{tpu_custom_call.1} parent=1 // pred_region
      %s56 = ssub.s32 128, 128
      %57 = vsyncadd [#allocation10], %s56
      %s59 = sshll.u32 [#allocation9], 4
      %s60 = int_to_ptr.vmem [resolvable:$true] %s59
      %62 = dma.hbm_to_vmem [thread:$0]  %s2, 128, %s60, [#allocation10]
    $region9: #{tpu_custom_call.1} parent=1 // pred_fallthru
      _
    // Predicated region
    $region10: #{tpu_custom_call.1} parent=1 // pred_check
      _
    $region11: #{tpu_custom_call.1} parent=1 // pred_check_branch
      %64 = sbr.rel (0) target = $region13
    $region12: #{tpu_custom_call.1} parent=1 // pred_region
      %s66 = ssub.s32 128, 128
      %67 = vsyncadd [#allocation10], %s66
      %s69 = sshll.u32 [#allocation11], 4
      %s70 = int_to_ptr.vmem [resolvable:$true] %s69
      %72 = dma.hbm_to_vmem [thread:$0]  %s3, 128, %s70, [#allocation10]
    $region13: #{tpu_custom_call.1} parent=1 // pred_fallthru
      _
    // Predicated region
    $region14: #{tpu_custom_call.1} parent=1 // pred_check
      _
    $region15: #{tpu_custom_call.1} parent=1 // pred_check_branch
      %74 = sbr.rel (0) target = $region17
    $region16: #{tpu_custom_call.1} parent=1 // pred_region
      %s76 = ssub.s32 128, 128
      %77 = vsyncadd [#allocation13], %s76
      %s79 = sshll.u32 [#allocation12], 4
      %s80 = int_to_ptr.vmem [resolvable:$true] %s79
      %82 = dma.hbm_to_vmem [thread:$0]  %s4, 128, %s80, [#allocation13]
    $region17: #{tpu_custom_call.1} parent=1 // pred_fallthru
      _
    // Predicated region
    $region18: #{tpu_custom_call.1} parent=1 // pred_check
      _
    $region19: #{tpu_custom_call.1} parent=1 // pred_check_branch
      %84 = sbr.rel (0) target = $region21
    $region20: #{tpu_custom_call.1} parent=1 // pred_region
      %s86 = ssub.s32 128, 128
      %87 = vsyncadd [#allocation13], %s86
      %s89 = sshll.u32 [#allocation14], 4
      %s90 = int_to_ptr.vmem [resolvable:$true] %s89
      %92 = dma.hbm_to_vmem [thread:$0]  %s5, 128, %s90, [#allocation13]
    $region21: #{tpu_custom_call.1} parent=1 // pred_fallthru
      _
    // Predicated region
    $region22: #{tpu_custom_call.1} parent=1 // pred_check
      _
    $region23: #{tpu_custom_call.1} parent=1 // pred_check_branch
      %94 = sbr.rel (0) target = $region25
    $region24: #{tpu_custom_call.1} parent=1 // pred_region
      %95 = dma.done [#allocation7], 2048
    $region25: #{tpu_custom_call.1} parent=1 // pred_fallthru
      _
    // Predicated region
    $region26: #{tpu_custom_call.1} parent=1 // pred_check
      _
    $region27: #{tpu_custom_call.1} parent=1 // pred_check_branch
      %97 = sbr.rel (0) target = $region29
    $region28: #{tpu_custom_call.1} parent=1 // pred_region
      %98 = dma.done [#allocation10], 128
    $region29: #{tpu_custom_call.1} parent=1 // pred_fallthru
      _
    // Predicated region
    $region30: #{tpu_custom_call.1} parent=1 // pred_check
      _
    $region31: #{tpu_custom_call.1} parent=1 // pred_check_branch
      %100 = sbr.rel (0) target = $region33
    $region32: #{tpu_custom_call.1} parent=1 // pred_region
      %101 = dma.done [#allocation10], 128
    $region33: #{tpu_custom_call.1} parent=1 // pred_fallthru
      _
    // Predicated region
    $region34: #{tpu_custom_call.1} parent=1 // pred_check
      _
    $region35: #{tpu_custom_call.1} parent=1 // pred_check_branch
      %103 = sbr.rel (0) target = $region37
    $region36: #{tpu_custom_call.1} parent=1 // pred_region
      %104 = dma.done [#allocation13], 128
    $region37: #{tpu_custom_call.1} parent=1 // pred_fallthru
      _
    // Predicated region
    $region38: #{tpu_custom_call.1} parent=1 // pred_check
      _
    $region39: #{tpu_custom_call.1} parent=1 // pred_check_branch
      %106 = sbr.rel (0) target = $region41
    $region40: #{tpu_custom_call.1} parent=1 // pred_region
      %107 = dma.done [#allocation13], 128
    $region41: #{tpu_custom_call.1} parent=1 // pred_fallthru
      _
    %v108 = vld [vmem:[#allocation9] sm:$0xff]
    %v109 = vld [vmem:[#allocation11] sm:$0xff]
    %v110 = vld [vmem:[#allocation12] sm:$0xff]
    %v111 = vld [vmem:[#allocation14] sm:$0xff]
    %v112 = vlaneseq
    %v113 = vand.u32 %v112, 127
    %s114 = smul.u32 0, 16
    %s115 = sld [smem:[#allocation5]]
    %s116 = ssub.s32 %s115, %s114
    %p117 = scmp.gt.s32.totalorder %s116, 0
    %s118 = scalar_select %p117, %s116, 0
    %p119 = scmp.lt.s32.totalorder %s118, 16
    %s120 = scalar_select %p119, %s118, 16
    %p121 = scmp.gt.s32.totalorder %s120, 0
    // Predicated region
    $region42: #{tpu_custom_call.1} parent=1 // pred_check
      %p122 = pneg %p121
    $region43: #{tpu_custom_call.1} parent=1 // pred_check_branch
      %124 = sbr.rel (%p122) target = $region45
    $region44: #{tpu_custom_call.1} parent=1 // pred_region
      %v125 = vlaneseq
      %v126 = vshrl.u32 %v125, 7
      %v127 = vadd.s32 %v126, 8
      %v128 = vadd.s32 %v126, 16
      %v129 = vadd.s32 %v126, 24
      %v130 = vlaneseq
      %v131 = vshrl.u32 %v130, 7
      %v132 = vsub.s32 0, %v131
      %v133 = vrot.slane %v108, %v132
      %vm134 = vcmp.eq.s32.totalorder %v126, %v133
      %vm135 = vcmp.eq.s32.totalorder %v127, %v133
      %vm136 = vcmp.eq.s32.totalorder %v128, %v133
      %vm137 = vcmp.eq.s32.totalorder %v129, %v133
      %v138 = vsel %vm134, 1, 0
      %v139 = vsel %vm135, 1, 0
      %v140 = vsel %vm136, 1, 0
      %v141 = vsel %vm137, 1, 0
      %v142 = vcvt.s32.f32 %v138
      %v143 = vcvt.s32.f32 %v139
      %v144 = vcvt.s32.f32 %v140
      %v145 = vcvt.s32.f32 %v141
      %v146 = vld [vmem:[#allocation6] sm:$0x1]
      %v147 = vld [vmem:[#allocation6 + $0x8] sm:$0x1]
      %v148 = vld [vmem:[#allocation6 + $0x10] sm:$0x1]
      %v149 = vld [vmem:[#allocation6 + $0x18] sm:$0x1]
      %v150 = vld [vmem:[#allocation6 + $0x20] sm:$0x1]
      %v151 = vld [vmem:[#allocation6 + $0x28] sm:$0x1]
      %v152 = vld [vmem:[#allocation6 + $0x30] sm:$0x1]
      %v153 = vld [vmem:[#allocation6 + $0x38] sm:$0x1]
      %v154 = vld [vmem:[#allocation6 + $0x40] sm:$0x1]
      %v155 = vld [vmem:[#allocation6 + $0x48] sm:$0x1]
      %v156 = vld [vmem:[#allocation6 + $0x50] sm:$0x1]
      %v157 = vld [vmem:[#allocation6 + $0x58] sm:$0x1]
      %v158 = vld [vmem:[#allocation6 + $0x60] sm:$0x1]
      %v159 = vld [vmem:[#allocation6 + $0x68] sm:$0x1]
      %v160 = vld [vmem:[#allocation6 + $0x70] sm:$0x1]
      %v161 = vld [vmem:[#allocation6 + $0x78] sm:$0x1]
      %v178 = vrot.slane %v147, 7
      %vm179 = vcmask 1041409
      %v180 = vsel %vm179, %v178, %v146
      %v181 = vrot.slane %v148, 6
      %vm182 = vcmask 1042434
      %v183 = vsel %vm182, %v181, %v180
      %v184 = vrot.slane %v149, 5
      %vm185 = vcmask 1043459
      %v186 = vsel %vm185, %v184, %v183
      %v187 = vrot.slane %v150, 4
      %vm188 = vcmask 1044484
      %v189 = vsel %vm188, %v187, %v186
      %v190 = vrot.slane %v151, 3
      %vm191 = vcmask 1045509
      %v192 = vsel %vm191, %v190, %v189
      %v193 = vrot.slane %v152, 2
      %vm194 = vcmask 1046534
      %v195 = vsel %vm194, %v193, %v192
      %v196 = vrot.slane %v153, 1
      %vm197 = vcmask 1047559
      %v198 = vsel %vm197, %v196, %v195
      %v199 = vrot.slane %v155, 7
      %v200 = vsel %vm179, %v199, %v154
      %v201 = vrot.slane %v156, 6
      %v202 = vsel %vm182, %v201, %v200
      %v203 = vrot.slane %v157, 5
      %v204 = vsel %vm185, %v203, %v202
      %v205 = vrot.slane %v158, 4
      %v206 = vsel %vm188, %v205, %v204
      %v207 = vrot.slane %v159, 3
      %v208 = vsel %vm191, %v207, %v206
      %v209 = vrot.slane %v160, 2
      %v210 = vsel %vm194, %v209, %v208
      %v211 = vrot.slane %v161, 1
      %v212 = vsel %vm197, %v211, %v210
      %vm213 = vcmask 261120
      %v214 = vsel %vm213, %v198, 0
      %v216 = vsel %vm213, %v212, 0
      %218 = vmatprep.subr.mxu0 0.0
      %219 = vmatpush1.msra.mxu0 %v142
      %220 = vmatprep.subr.mxu0 0.0
      %221 = vmatpush1.msra.mxu0 %v143
      %222 = vmatprep.subr.mxu0 0.0
      %223 = vmatpush1.msra.mxu0 %v144
      %224 = vmatprep.subr.mxu0 0.0
      %225 = vmatpush1.msra.mxu0 %v145
      %226 = vmatprep.subr.mxu0 0.0
      %227 = vmatpush1.msra.mxu0 0.0
      %228 = vmatprep.subr.mxu0 0.0
      %229 = vmatpush1.msra.mxu0 0.0
      %230 = vmatprep.subr.mxu0 0.0
      %231 = vmatpush1.msra.mxu0 0.0
      %232 = vmatprep.subr.mxu0 0.0
      %233 = vmatpush1.msra.mxu0 0.0
      %234 = vmatprep.subr.mxu0 0.0
      %235 = vmatpush1.msra.mxu0 0.0
      %236 = vmatprep.subr.mxu0 0.0
      %237 = vmatpush1.msra.mxu0 0.0
      %238 = vmatprep.subr.mxu0 0.0
      %239 = vmatpush1.msra.mxu0 0.0
      %240 = vmatprep.subr.mxu0 0.0
      %241 = vmatpush1.msra.mxu0 0.0
      %242 = vmatprep.subr.mxu0 0.0
      %243 = vmatpush1.msra.mxu0 0.0
      %244 = vmatprep.subr.mxu0 0.0
      %245 = vmatpush1.msra.mxu0 0.0
      %246 = vmatprep.subr.mxu0 0.0
      %247 = vmatpush1.msra.mxu0 0.0
      %248 = vmatprep.subr.mxu0 0.0
      %249 = vmatpush1.msra.mxu0 0.0
      %250 = vmatprep.subr.mxu0 0.0
      %251 = vmatpush1.msra.mxu0 0.0
      %252 = vmatprep.subr.mxu0 0.0
      %253 = vmatpush1.msra.mxu0 0.0
      %254 = vmatprep.subr.mxu0 0.0
      %255 = vmatpush1.msra.mxu0 0.0
      %256 = vmatprep.subr.mxu0 0.0
      %257 = vmatpush1.msra.mxu0 0.0
      %258 = vmatprep.subr.mxu0 0.0
      %259 = vmatpush1.msra.mxu0 0.0
      %260 = vmatprep.subr.mxu0 0.0
      %261 = vmatpush1.msra.mxu0 0.0
      %262 = vmatprep.subr.mxu0 0.0
      %263 = vmatpush1.msra.mxu0 0.0
      %264 = vmatprep.subr.mxu0 0.0
      %265 = vmatpush1.msra.mxu0 0.0
      %266 = vmatprep.subr.mxu0 0.0
      %267 = vmatpush1.msra.mxu0 0.0
      %268 = vmatprep.subr.mxu0 0.0
      %269 = vmatpush1.msra.mxu0 0.0
      %270 = vmatprep.subr.mxu0 0.0
      %271 = vmatpush1.msra.mxu0 0.0
      %272 = vmatprep.subr.mxu0 0.0
      %273 = vmatpush1.msra.mxu0 0.0
      %274 = vmatprep.subr.mxu0 0.0
      %275 = vmatpush1.msra.mxu0 0.0
      %276 = vmatprep.subr.mxu0 0.0
      %277 = vmatpush1.msra.mxu0 0.0
      %278 = vmatprep.subr.mxu0 0.0
      %279 = vmatpush1.msra.mxu0 0.0
      %280 = vmatprep.subr.mxu0 0.0
      %281 = vmatpush1.msra.mxu0 0.0
      %282 = vmatprep.mubr.f32.mxu0 0.0
      %283 = vmatmul.mubr.f32.gmra.mrb[0].mxu0 %v214
      %v284 = vpop.f32.mrb[0].mxu0
      %v285 = vadd.f32 0.0, %v284
      %v286 = vpop.f32.mrb[0].mxu0
      %287 = vmatprep.mubr.f32.mxu0 0.0
      %288 = vmatmul.mubr.f32.gmra.mrb[0].mxu0 %v216
      %v289 = vpop.f32.mrb[0].mxu0
      %v290 = vadd.f32 0.0, %v289
      %v291 = vpop.f32.mrb[0].mxu0
      %292 = vdwg.mxu0
      %v295 = vcombine.high %v285, %v285
      %v297 = vunpack.c.l.s4 1966171168
      %v298 = vunpack.c.0.s8 %v297
      %v299 = vlaneseq
      %v300 = vshrl.u32 %v299, 7
      %v301 = vsub.s32 %v298, %v300
      %v302 = vrot.slane %v285, %v301
      %v304 = vunpack.c.l.s4 1966171168
      %v305 = vunpack.c.0.s8 %v304
      %v306 = vlaneseq
      %v307 = vshrl.u32 %v306, 7
      %v308 = vsub.s32 %v305, %v307
      %v309 = vrot.slane %v295, %v308
      %v310 = vcombine.high %v302, %v302
      %v311 = vcombine.high %v309, %v309
      %v313 = vunpack.c.l.s4 1966171168
      %v314 = vunpack.c.0.s8 %v313
      %v315 = vlaneseq
      %v316 = vshrl.u32 %v315, 7
      %v317 = vsub.s32 %v314, %v316
      %v318 = vrot.slane %v302, %v317
      %v320 = vunpack.c.l.s4 1966171168
      %v321 = vunpack.c.0.s8 %v320
      %v322 = vlaneseq
      %v323 = vshrl.u32 %v322, 7
      %v324 = vsub.s32 %v321, %v323
      %v325 = vrot.slane %v309, %v324
      %v327 = vunpack.c.l.s4 1966171168
      %v328 = vunpack.c.0.s8 %v327
      %v329 = vlaneseq
      %v330 = vshrl.u32 %v329, 7
      %v331 = vsub.s32 %v328, %v330
      %v332 = vrot.slane %v310, %v331
      %v334 = vunpack.c.l.s4 1966171168
      %v335 = vunpack.c.0.s8 %v334
      %v336 = vlaneseq
      %v337 = vshrl.u32 %v336, 7
      %v338 = vsub.s32 %v335, %v337
      %v339 = vrot.slane %v311, %v338
      %v340 = vcombine.high %v318, %v318
      %v341 = vcombine.high %v325, %v325
      %v342 = vcombine.high %v332, %v332
      %v343 = vcombine.high %v339, %v339
      %v344 = vcombine.high %v290, %v290
      %v346 = vunpack.c.l.s4 1966171168
      %v347 = vunpack.c.0.s8 %v346
      %v348 = vlaneseq
      %v349 = vshrl.u32 %v348, 7
      %v350 = vsub.s32 %v347, %v349
      %v351 = vrot.slane %v290, %v350
      %v353 = vunpack.c.l.s4 1966171168
      %v354 = vunpack.c.0.s8 %v353
      %v355 = vlaneseq
      %v356 = vshrl.u32 %v355, 7
      %v357 = vsub.s32 %v354, %v356
      %v358 = vrot.slane %v344, %v357
      %v359 = vcombine.high %v351, %v351
      %v360 = vcombine.high %v358, %v358
      %v362 = vunpack.c.l.s4 1966171168
      %v363 = vunpack.c.0.s8 %v362
      %v364 = vlaneseq
      %v365 = vshrl.u32 %v364, 7
      %v366 = vsub.s32 %v363, %v365
      %v367 = vrot.slane %v351, %v366
      %v369 = vunpack.c.l.s4 1966171168
      %v370 = vunpack.c.0.s8 %v369
      %v371 = vlaneseq
      %v372 = vshrl.u32 %v371, 7
      %v373 = vsub.s32 %v370, %v372
      %v374 = vrot.slane %v358, %v373
      %v376 = vunpack.c.l.s4 1966171168
      %v377 = vunpack.c.0.s8 %v376
      %v378 = vlaneseq
      %v379 = vshrl.u32 %v378, 7
      %v380 = vsub.s32 %v377, %v379
      %v381 = vrot.slane %v359, %v380
      %v383 = vunpack.c.l.s4 1966171168
      %v384 = vunpack.c.0.s8 %v383
      %v385 = vlaneseq
      %v386 = vshrl.u32 %v385, 7
      %v387 = vsub.s32 %v384, %v386
      %v388 = vrot.slane %v360, %v387
      %v389 = vcombine.high %v367, %v367
      %v390 = vcombine.high %v374, %v374
      %v391 = vcombine.high %v381, %v381
      %v392 = vcombine.high %v388, %v388
      %409 = vst [vmem:[#allocation2] sm:$0x1] %v318
      %410 = vst [vmem:[#allocation2 + $0x8] sm:$0x1] %v332
      %411 = vst [vmem:[#allocation2 + $0x10] sm:$0x1] %v340
      %412 = vst [vmem:[#allocation2 + $0x18] sm:$0x1] %v342
      %413 = vst [vmem:[#allocation2 + $0x20] sm:$0x1] %v325
      %414 = vst [vmem:[#allocation2 + $0x28] sm:$0x1] %v339
      %415 = vst [vmem:[#allocation2 + $0x30] sm:$0x1] %v341
      %416 = vst [vmem:[#allocation2 + $0x38] sm:$0x1] %v343
      %417 = vst [vmem:[#allocation2 + $0x40] sm:$0x1] %v367
      %418 = vst [vmem:[#allocation2 + $0x48] sm:$0x1] %v381
      %419 = vst [vmem:[#allocation2 + $0x50] sm:$0x1] %v389
      %420 = vst [vmem:[#allocation2 + $0x58] sm:$0x1] %v391
      %421 = vst [vmem:[#allocation2 + $0x60] sm:$0x1] %v374
      %422 = vst [vmem:[#allocation2 + $0x68] sm:$0x1] %v388
      %423 = vst [vmem:[#allocation2 + $0x70] sm:$0x1] %v390
      %424 = vst [vmem:[#allocation2 + $0x78] sm:$0x1] %v392
      %v425 = vlaneseq
      %v426 = vshrl.u32 %v425, 7
      %v427 = vsub.s32 1, %v426
      %v428 = vrot.slane %v108, %v427
      %vm429 = vcmp.eq.s32.totalorder %v126, %v428
      %vm430 = vcmp.eq.s32.totalorder %v127, %v428
      %vm431 = vcmp.eq.s32.totalorder %v128, %v428
      %vm432 = vcmp.eq.s32.totalorder %v129, %v428
      %v433 = vsel %vm429, 1, 0
      %v434 = vsel %vm430, 1, 0
      %v435 = vsel %vm431, 1, 0
      %v436 = vsel %vm432, 1, 0
      %v437 = vcvt.s32.f32 %v433
      %v438 = vcvt.s32.f32 %v434
      %v439 = vcvt.s32.f32 %v435
      %v440 = vcvt.s32.f32 %v436
      %v441 = vld [vmem:[#allocation6 + $0x1] sm:$0x1]
      %v442 = vld [vmem:[#allocation6 + $0x9] sm:$0x1]
      %v443 = vld [vmem:[#allocation6 + $0x11] sm:$0x1]
      %v444 = vld [vmem:[#allocation6 + $0x19] sm:$0x1]
      %v445 = vld [vmem:[#allocation6 + $0x21] sm:$0x1]
      %v446 = vld [vmem:[#allocation6 + $0x29] sm:$0x1]
      %v447 = vld [vmem:[#allocation6 + $0x31] sm:$0x1]
      %v448 = vld [vmem:[#allocation6 + $0x39] sm:$0x1]
      %v449 = vld [vmem:[#allocation6 + $0x41] sm:$0x1]
      %v450 = vld [vmem:[#allocation6 + $0x49] sm:$0x1]
      %v451 = vld [vmem:[#allocation6 + $0x51] sm:$0x1]
      %v452 = vld [vmem:[#allocation6 + $0x59] sm:$0x1]
      %v453 = vld [vmem:[#allocation6 + $0x61] sm:$0x1]
      %v454 = vld [vmem:[#allocation6 + $0x69] sm:$0x1]
      %v455 = vld [vmem:[#allocation6 + $0x71] sm:$0x1]
      %v456 = vld [vmem:[#allocation6 + $0x79] sm:$0x1]
      %v473 = vrot.slane %v442, 7
      %v474 = vsel %vm179, %v473, %v441
      %v475 = vrot.slane %v443, 6
      %v476 = vsel %vm182, %v475, %v474
      %v477 = vrot.slane %v444, 5
      %v478 = vsel %vm185, %v477, %v476
      %v479 = vrot.slane %v445, 4
      %v480 = vsel %vm188, %v479, %v478
      %v481 = vrot.slane %v446, 3
      %v482 = vsel %vm191, %v481, %v480
      %v483 = vrot.slane %v447, 2
      %v484 = vsel %vm194, %v483, %v482
      %v485 = vrot.slane %v448, 1
      %v486 = vsel %vm197, %v485, %v484
      %v487 = vrot.slane %v450, 7
      %v488 = vsel %vm179, %v487, %v449
      %v489 = vrot.slane %v451, 6
      %v490 = vsel %vm182, %v489, %v488
      %v491 = vrot.slane %v452, 5
      %v492 = vsel %vm185, %v491, %v490
      %v493 = vrot.slane %v453, 4
      %v494 = vsel %vm188, %v493, %v492
      %v495 = vrot.slane %v454, 3
      %v496 = vsel %vm191, %v495, %v494
      %v497 = vrot.slane %v455, 2
      %v498 = vsel %vm194, %v497, %v496
      %v499 = vrot.slane %v456, 1
      %v500 = vsel %vm197, %v499, %v498
      %v501 = vsel %vm213, %v486, 0
      %v503 = vsel %vm213, %v500, 0
      %505 = vmatprep.subr.mxu0 0.0
      %506 = vmatpush1.msra.mxu0 %v437
      %507 = vmatprep.subr.mxu0 0.0
      %508 = vmatpush1.msra.mxu0 %v438
      %509 = vmatprep.subr.mxu0 0.0
      %510 = vmatpush1.msra.mxu0 %v439
      %511 = vmatprep.subr.mxu0 0.0
      %512 = vmatpush1.msra.mxu0 %v440
      %513 = vmatprep.subr.mxu0 0.0
      %514 = vmatpush1.msra.mxu0 0.0
      %515 = vmatprep.subr.mxu0 0.0
      %516 = vmatpush1.msra.mxu0 0.0
      %517 = vmatprep.subr.mxu0 0.0
      %518 = vmatpush1.msra.mxu0 0.0
      %519 = vmatprep.subr.mxu0 0.0
      %520 = vmatpush1.msra.mxu0 0.0
      %521 = vmatprep.subr.mxu0 0.0
      %522 = vmatpush1.msra.mxu0 0.0
      %523 = vmatprep.subr.mxu0 0.0
      %524 = vmatpush1.msra.mxu0 0.0
      %525 = vmatprep.subr.mxu0 0.0
      %526 = vmatpush1.msra.mxu0 0.0
      %527 = vmatprep.subr.mxu0 0.0
      %528 = vmatpush1.msra.mxu0 0.0
      %529 = vmatprep.subr.mxu0 0.0
      %530 = vmatpush1.msra.mxu0 0.0
      %531 = vmatprep.subr.mxu0 0.0
      %532 = vmatpush1.msra.mxu0 0.0
      %533 = vmatprep.subr.mxu0 0.0
      %534 = vmatpush1.msra.mxu0 0.0
      %535 = vmatprep.subr.mxu0 0.0
      %536 = vmatpush1.msra.mxu0 0.0
      %537 = vmatprep.subr.mxu0 0.0
      %538 = vmatpush1.msra.mxu0 0.0
      %539 = vmatprep.subr.mxu0 0.0
      %540 = vmatpush1.msra.mxu0 0.0
      %541 = vmatprep.subr.mxu0 0.0
      %542 = vmatpush1.msra.mxu0 0.0
      %543 = vmatprep.subr.mxu0 0.0
      %544 = vmatpush1.msra.mxu0 0.0
      %545 = vmatprep.subr.mxu0 0.0
      %546 = vmatpush1.msra.mxu0 0.0
      %547 = vmatprep.subr.mxu0 0.0
      %548 = vmatpush1.msra.mxu0 0.0
      %549 = vmatprep.subr.mxu0 0.0
      %550 = vmatpush1.msra.mxu0 0.0
      %551 = vmatprep.subr.mxu0 0.0
      %552 = vmatpush1.msra.mxu0 0.0
      %553 = vmatprep.subr.mxu0 0.0
      %554 = vmatpush1.msra.mxu0 0.0
      %555 = vmatprep.subr.mxu0 0.0
      %556 = vmatpush1.msra.mxu0 0.0
      %557 = vmatprep.subr.mxu0 0.0
      %558 = vmatpush1.msra.mxu0 0.0
      %559 = vmatprep.subr.mxu0 0.0
      %560 = vmatpush1.msra.mxu0 0.0
      %561 = vmatprep.subr.mxu0 0.0
      %562 = vmatpush1.msra.mxu0 0.0
      %563 = vmatprep.subr.mxu0 0.0
      %564 = vmatpush1.msra.mxu0 0.0
      %565 = vmatprep.subr.mxu0 0.0
      %566 = vmatpush1.msra.mxu0 0.0
      %567 = vmatprep.subr.mxu0 0.0
      %568 = vmatpush1.msra.mxu0 0.0
      %569 = vmatprep.mubr.f32.mxu0 0.0
      %570 = vmatmul.mubr.f32.gmra.mrb[0].mxu0 %v501
      %v571 = vpop.f32.mrb[0].mxu0
      %v572 = vadd.f32 0.0, %v571
      %v573 = vpop.f32.mrb[0].mxu0
      %574 = vmatprep.mubr.f32.mxu0 0.0
      %575 = vmatmul.mubr.f32.gmra.mrb[0].mxu0 %v503
      %v576 = vpop.f32.mrb[0].mxu0
      %v577 = vadd.f32 0.0, %v576
      %v578 = vpop.f32.mrb[0].mxu0
      %579 = vdwg.mxu0
      %v582 = vcombine.high %v572, %v572
      %v584 = vunpack.c.l.s4 1966171168
      %v585 = vunpack.c.0.s8 %v584
      %v586 = vlaneseq
      %v587 = vshrl.u32 %v586, 7
      %v588 = vsub.s32 %v585, %v587
      %v589 = vrot.slane %v572, %v588
      %v591 = vunpack.c.l.s4 1966171168
      %v592 = vunpack.c.0.s8 %v591
      %v593 = vlaneseq
      %v594 = vshrl.u32 %v593, 7
      %v595 = vsub.s32 %v592, %v594
      %v596 = vrot.slane %v582, %v595
      %v597 = vcombine.high %v589, %v589
      %v598 = vcombine.high %v596, %v596
      %v600 = vunpack.c.l.s4 1966171168
      %v601 = vunpack.c.0.s8 %v600
      %v602 = vlaneseq
      %v603 = vshrl.u32 %v602, 7
      %v604 = vsub.s32 %v601, %v603
      %v605 = vrot.slane %v589, %v604
      %v607 = vunpack.c.l.s4 1966171168
      %v608 = vunpack.c.0.s8 %v607
      %v609 = vlaneseq
      %v610 = vshrl.u32 %v609, 7
      %v611 = vsub.s32 %v608, %v610
      %v612 = vrot.slane %v596, %v611
      %v614 = vunpack.c.l.s4 1966171168
      %v615 = vunpack.c.0.s8 %v614
      %v616 = vlaneseq
      %v617 = vshrl.u32 %v616, 7
      %v618 = vsub.s32 %v615, %v617
      %v619 = vrot.slane %v597, %v618
      %v621 = vunpack.c.l.s4 1966171168
      %v622 = vunpack.c.0.s8 %v621
      %v623 = vlaneseq
      %v624 = vshrl.u32 %v623, 7
      %v625 = vsub.s32 %v622, %v624
      %v626 = vrot.slane %v598, %v625
      %v627 = vcombine.high %v605, %v605
      %v628 = vcombine.high %v612, %v612
      %v629 = vcombine.high %v619, %v619
      %v630 = vcombine.high %v626, %v626
      %v631 = vcombine.high %v577, %v577
      %v633 = vunpack.c.l.s4 1966171168
      %v634 = vunpack.c.0.s8 %v633
      %v635 = vlaneseq
      %v636 = vshrl.u32 %v635, 7
      %v637 = vsub.s32 %v634, %v636
      %v638 = vrot.slane %v577, %v637
      %v640 = vunpack.c.l.s4 1966171168
      %v641 = vunpack.c.0.s8 %v640
      %v642 = vlaneseq
      %v643 = vshrl.u32 %v642, 7
      %v644 = vsub.s32 %v641, %v643
      %v645 = vrot.slane %v631, %v644
      %v646 = vcombine.high %v638, %v638
      %v647 = vcombine.high %v645, %v645
      %v649 = vunpack.c.l.s4 1966171168
      %v650 = vunpack.c.0.s8 %v649
      %v651 = vlaneseq
      %v652 = vshrl.u32 %v651, 7
      %v653 = vsub.s32 %v650, %v652
      %v654 = vrot.slane %v638, %v653
      %v656 = vunpack.c.l.s4 1966171168
      %v657 = vunpack.c.0.s8 %v656
      %v658 = vlaneseq
      %v659 = vshrl.u32 %v658, 7
      %v660 = vsub.s32 %v657, %v659
      %v661 = vrot.slane %v645, %v660
      %v663 = vunpack.c.l.s4 1966171168
      %v664 = vunpack.c.0.s8 %v663
      %v665 = vlaneseq
      %v666 = vshrl.u32 %v665, 7
      %v667 = vsub.s32 %v664, %v666
      %v668 = vrot.slane %v646, %v667
      %v670 = vunpack.c.l.s4 1966171168
      %v671 = vunpack.c.0.s8 %v670
      %v672 = vlaneseq
      %v673 = vshrl.u32 %v672, 7
      %v674 = vsub.s32 %v671, %v673
      %v675 = vrot.slane %v647, %v674
      %v676 = vcombine.high %v654, %v654
      %v677 = vcombine.high %v661, %v661
      %v678 = vcombine.high %v668, %v668
      %v679 = vcombine.high %v675, %v675
      %696 = vst [vmem:[#allocation2 + $0x1] sm:$0x1] %v605
      %697 = vst [vmem:[#allocation2 + $0x9] sm:$0x1] %v619
      %698 = vst [vmem:[#allocation2 + $0x11] sm:$0x1] %v627
      %699 = vst [vmem:[#allocation2 + $0x19] sm:$0x1] %v629
      %700 = vst [vmem:[#allocation2 + $0x21] sm:$0x1] %v612
      %701 = vst [vmem:[#allocation2 + $0x29] sm:$0x1] %v626
      %702 = vst [vmem:[#allocation2 + $0x31] sm:$0x1] %v628
      %703 = vst [vmem:[#allocation2 + $0x39] sm:$0x1] %v630
      %704 = vst [vmem:[#allocation2 + $0x41] sm:$0x1] %v654
      %705 = vst [vmem:[#allocation2 + $0x49] sm:$0x1] %v668
      %706 = vst [vmem:[#allocation2 + $0x51] sm:$0x1] %v676
      %707 = vst [vmem:[#allocation2 + $0x59] sm:$0x1] %v678
      %708 = vst [vmem:[#allocation2 + $0x61] sm:$0x1] %v661
      %709 = vst [vmem:[#allocation2 + $0x69] sm:$0x1] %v675
      %710 = vst [vmem:[#allocation2 + $0x71] sm:$0x1] %v677
      %711 = vst [vmem:[#allocation2 + $0x79] sm:$0x1] %v679
      %v712 = vlaneseq
      %v713 = vshrl.u32 %v712, 7
      %v714 = vsub.s32 2, %v713
      %v715 = vrot.slane %v108, %v714
      %vm716 = vcmp.eq.s32.totalorder %v126, %v715
      %vm717 = vcmp.eq.s32.totalorder %v127, %v715
      %vm718 = vcmp.eq.s32.totalorder %v128, %v715
      %vm719 = vcmp.eq.s32.totalorder %v129, %v715
      %v720 = vsel %vm716, 1, 0
      %v721 = vsel %vm717, 1, 0
      %v722 = vsel %vm718, 1, 0
      %v723 = vsel %vm719, 1, 0
      %v724 = vcvt.s32.f32 %v720
      %v725 = vcvt.s32.f32 %v721
      %v726 = vcvt.s32.f32 %v722
      %v727 = vcvt.s32.f32 %v723
      %v728 = vld [vmem:[#allocation6 + $0x2] sm:$0x1]
      %v729 = vld [vmem:[#allocation6 + $0xa] sm:$0x1]
      %v730 = vld [vmem:[#allocation6 + $0x12] sm:$0x1]
      %v731 = vld [vmem:[#allocation6 + $0x1a] sm:$0x1]
      %v732 = vld [vmem:[#allocation6 + $0x22] sm:$0x1]
      %v733 = vld [vmem:[#allocation6 + $0x2a] sm:$0x1]
      %v734 = vld [vmem:[#allocation6 + $0x32] sm:$0x1]
      %v735 = vld [vmem:[#allocation6 + $0x3a] sm:$0x1]
      %v736 = vld [vmem:[#allocation6 + $0x42] sm:$0x1]
      %v737 = vld [vmem:[#allocation6 + $0x4a] sm:$0x1]
      %v738 = vld [vmem:[#allocation6 + $0x52] sm:$0x1]
      %v739 = vld [vmem:[#allocation6 + $0x5a] sm:$0x1]
      %v740 = vld [vmem:[#allocation6 + $0x62] sm:$0x1]
      %v741 = vld [vmem:[#allocation6 + $0x6a] sm:$0x1]
      %v742 = vld [vmem:[#allocation6 + $0x72] sm:$0x1]
      %v743 = vld [vmem:[#allocation6 + $0x7a] sm:$0x1]
      %v760 = vrot.slane %v729, 7
      %v761 = vsel %vm179, %v760, %v728
      %v762 = vrot.slane %v730, 6
      %v763 = vsel %vm182, %v762, %v761
      %v764 = vrot.slane %v731, 5
      %v765 = vsel %vm185, %v764, %v763
      %v766 = vrot.slane %v732, 4
      %v767 = vsel %vm188, %v766, %v765
      %v768 = vrot.slane %v733, 3
      %v769 = vsel %vm191, %v768, %v767
      %v770 = vrot.slane %v734, 2
      %v771 = vsel %vm194, %v770, %v769
      %v772 = vrot.slane %v735, 1
      %v773 = vsel %vm197, %v772, %v771
      %v774 = vrot.slane %v737, 7
      %v775 = vsel %vm179, %v774, %v736
      %v776 = vrot.slane %v738, 6
      %v777 = vsel %vm182, %v776, %v775
      %v778 = vrot.slane %v739, 5
      %v779 = vsel %vm185, %v778, %v777
      %v780 = vrot.slane %v740, 4
      %v781 = vsel %vm188, %v780, %v779
      %v782 = vrot.slane %v741, 3
      %v783 = vsel %vm191, %v782, %v781
      %v784 = vrot.slane %v742, 2
      %v785 = vsel %vm194, %v784, %v783
      %v786 = vrot.slane %v743, 1
      %v787 = vsel %vm197, %v786, %v785
      %v788 = vsel %vm213, %v773, 0
      %v790 = vsel %vm213, %v787, 0
      %792 = vmatprep.subr.mxu0 0.0
      %793 = vmatpush1.msra.mxu0 %v724
      %794 = vmatprep.subr.mxu0 0.0
      %795 = vmatpush1.msra.mxu0 %v725
      %796 = vmatprep.subr.mxu0 0.0
      %797 = vmatpush1.msra.mxu0 %v726
      %798 = vmatprep.subr.mxu0 0.0
      %799 = vmatpush1.msra.mxu0 %v727
      %800 = vmatprep.subr.mxu0 0.0
      %801 = vmatpush1.msra.mxu0 0.0
      %802 = vmatprep.subr.mxu0 0.0
      %803 = vmatpush1.msra.mxu0 0.0
      %804 = vmatprep.subr.mxu0 0.0
      %805 = vmatpush1.msra.mxu0 0.0
      %806 = vmatprep.subr.mxu0 0.0
      %807 = vmatpush1.msra.mxu0 0.0
      %808 = vmatprep.subr.mxu0 0.0
      %809 = vmatpush1.msra.mxu0 0.0
      %810 = vmatprep.subr.mxu0 0.0
      %811 = vmatpush1.msra.mxu0 0.0
      %812 = vmatprep.subr.mxu0 0.0
      %813 = vmatpush1.msra.mxu0 0.0
      %814 = vmatprep.subr.mxu0 0.0
      %815 = vmatpush1.msra.mxu0 0.0
      %816 = vmatprep.subr.mxu0 0.0
      %817 = vmatpush1.msra.mxu0 0.0
      %818 = vmatprep.subr.mxu0 0.0
      %819 = vmatpush1.msra.mxu0 0.0
      %820 = vmatprep.subr.mxu0 0.0
      %821 = vmatpush1.msra.mxu0 0.0
      %822 = vmatprep.subr.mxu0 0.0
      %823 = vmatpush1.msra.mxu0 0.0
      %824 = vmatprep.subr.mxu0 0.0
      %825 = vmatpush1.msra.mxu0 0.0
      %826 = vmatprep.subr.mxu0 0.0
      %827 = vmatpush1.msra.mxu0 0.0
      %828 = vmatprep.subr.mxu0 0.0
      %829 = vmatpush1.msra.mxu0 0.0
      %830 = vmatprep.subr.mxu0 0.0
      %831 = vmatpush1.msra.mxu0 0.0
      %832 = vmatprep.subr.mxu0 0.0
      %833 = vmatpush1.msra.mxu0 0.0
      %834 = vmatprep.subr.mxu0 0.0
      %835 = vmatpush1.msra.mxu0 0.0
      %836 = vmatprep.subr.mxu0 0.0
      %837 = vmatpush1.msra.mxu0 0.0
      %838 = vmatprep.subr.mxu0 0.0
      %839 = vmatpush1.msra.mxu0 0.0
      %840 = vmatprep.subr.mxu0 0.0
      %841 = vmatpush1.msra.mxu0 0.0
      %842 = vmatprep.subr.mxu0 0.0
      %843 = vmatpush1.msra.mxu0 0.0
      %844 = vmatprep.subr.mxu0 0.0
      %845 = vmatpush1.msra.mxu0 0.0
      %846 = vmatprep.subr.mxu0 0.0
      %847 = vmatpush1.msra.mxu0 0.0
      %848 = vmatprep.subr.mxu0 0.0
      %849 = vmatpush1.msra.mxu0 0.0
      %850 = vmatprep.subr.mxu0 0.0
      %851 = vmatpush1.msra.mxu0 0.0
      %852 = vmatprep.subr.mxu0 0.0
      %853 = vmatpush1.msra.mxu0 0.0
      %854 = vmatprep.subr.mxu0 0.0
      %855 = vmatpush1.msra.mxu0 0.0
      %856 = vmatprep.mubr.f32.mxu0 0.0
      %857 = vmatmul.mubr.f32.gmra.mrb[0].mxu0 %v788
      %v858 = vpop.f32.mrb[0].mxu0
      %v859 = vadd.f32 0.0, %v858
      %v860 = vpop.f32.mrb[0].mxu0
      %861 = vmatprep.mubr.f32.mxu0 0.0
      %862 = vmatmul.mubr.f32.gmra.mrb[0].mxu0 %v790
      %v863 = vpop.f32.mrb[0].mxu0
      %v864 = vadd.f32 0.0, %v863
      %v865 = vpop.f32.mrb[0].mxu0
      %866 = vdwg.mxu0
      %v869 = vcombine.high %v859, %v859
      %v871 = vunpack.c.l.s4 1966171168
      %v872 = vunpack.c.0.s8 %v871
      %v873 = vlaneseq
      %v874 = vshrl.u32 %v873, 7
      %v875 = vsub.s32 %v872, %v874
      %v876 = vrot.slane %v859, %v875
      %v878 = vunpack.c.l.s4 1966171168
      %v879 = vunpack.c.0.s8 %v878
      %v880 = vlaneseq
      %v881 = vshrl.u32 %v880, 7
      %v882 = vsub.s32 %v879, %v881
      %v883 = vrot.slane %v869, %v882
      %v884 = vcombine.high %v876, %v876
      %v885 = vcombine.high %v883, %v883
      %v887 = vunpack.c.l.s4 1966171168
      %v888 = vunpack.c.0.s8 %v887
      %v889 = vlaneseq
      %v890 = vshrl.u32 %v889, 7
      %v891 = vsub.s32 %v888, %v890
      %v892 = vrot.slane %v876, %v891
      %v894 = vunpack.c.l.s4 1966171168
      %v895 = vunpack.c.0.s8 %v894
      %v896 = vlaneseq
      %v897 = vshrl.u32 %v896, 7
      %v898 = vsub.s32 %v895, %v897
      %v899 = vrot.slane %v883, %v898
      %v901 = vunpack.c.l.s4 1966171168
      %v902 = vunpack.c.0.s8 %v901
      %v903 = vlaneseq
      %v904 = vshrl.u32 %v903, 7
      %v905 = vsub.s32 %v902, %v904
      %v906 = vrot.slane %v884, %v905
      %v908 = vunpack.c.l.s4 1966171168
      %v909 = vunpack.c.0.s8 %v908
      %v910 = vlaneseq
      %v911 = vshrl.u32 %v910, 7
      %v912 = vsub.s32 %v909, %v911
      %v913 = vrot.slane %v885, %v912
      %v914 = vcombine.high %v892, %v892
      %v915 = vcombine.high %v899, %v899
      %v916 = vcombine.high %v906, %v906
      %v917 = vcombine.high %v913, %v913
      %v918 = vcombine.high %v864, %v864
      %v920 = vunpack.c.l.s4 1966171168
      %v921 = vunpack.c.0.s8 %v920
      %v922 = vlaneseq
      %v923 = vshrl.u32 %v922, 7
      %v924 = vsub.s32 %v921, %v923
      %v925 = vrot.slane %v864, %v924
      %v927 = vunpack.c.l.s4 1966171168
      %v928 = vunpack.c.0.s8 %v927
      %v929 = vlaneseq
      %v930 = vshrl.u32 %v929, 7
      %v931 = vsub.s32 %v928, %v930
      %v932 = vrot.slane %v918, %v931
      %v933 = vcombine.high %v925, %v925
      %v934 = vcombine.high %v932, %v932
      %v936 = vunpack.c.l.s4 1966171168
      %v937 = vunpack.c.0.s8 %v936
      %v938 = vlaneseq
      %v939 = vshrl.u32 %v938, 7
      %v940 = vsub.s32 %v937, %v939
      %v941 = vrot.slane %v925, %v940
      %v943 = vunpack.c.l.s4 1966171168
      %v944 = vunpack.c.0.s8 %v943
      %v945 = vlaneseq
      %v946 = vshrl.u32 %v945, 7
      %v947 = vsub.s32 %v944, %v946
      %v948 = vrot.slane %v932, %v947
      %v950 = vunpack.c.l.s4 1966171168
      %v951 = vunpack.c.0.s8 %v950
      %v952 = vlaneseq
      %v953 = vshrl.u32 %v952, 7
      %v954 = vsub.s32 %v951, %v953
      %v955 = vrot.slane %v933, %v954
      %v957 = vunpack.c.l.s4 1966171168
      %v958 = vunpack.c.0.s8 %v957
      %v959 = vlaneseq
      %v960 = vshrl.u32 %v959, 7
      %v961 = vsub.s32 %v958, %v960
      %v962 = vrot.slane %v934, %v961
      %v963 = vcombine.high %v941, %v941
      %v964 = vcombine.high %v948, %v948
      %v965 = vcombine.high %v955, %v955
      %v966 = vcombine.high %v962, %v962
      %983 = vst [vmem:[#allocation2 + $0x2] sm:$0x1] %v892
      %984 = vst [vmem:[#allocation2 + $0xa] sm:$0x1] %v906
      %985 = vst [vmem:[#allocation2 + $0x12] sm:$0x1] %v914
      %986 = vst [vmem:[#allocation2 + $0x1a] sm:$0x1] %v916
      %987 = vst [vmem:[#allocation2 + $0x22] sm:$0x1] %v899
      %988 = vst [vmem:[#allocation2 + $0x2a] sm:$0x1] %v913
      %989 = vst [vmem:[#allocation2 + $0x32] sm:$0x1] %v915
      %990 = vst [vmem:[#allocation2 + $0x3a] sm:$0x1] %v917
      %991 = vst [vmem:[#allocation2 + $0x42] sm:$0x1] %v941
      %992 = vst [vmem:[#allocation2 + $0x4a] sm:$0x1] %v955
      %993 = vst [vmem:[#allocation2 + $0x52] sm:$0x1] %v963
      %994 = vst [vmem:[#allocation2 + $0x5a] sm:$0x1] %v965
      %995 = vst [vmem:[#allocation2 + $0x62] sm:$0x1] %v948
      %996 = vst [vmem:[#allocation2 + $0x6a] sm:$0x1] %v962
      %997 = vst [vmem:[#allocation2 + $0x72] sm:$0x1] %v964
      %998 = vst [vmem:[#allocation2 + $0x7a] sm:$0x1] %v966
      %v999 = vlaneseq
      %v1000 = vshrl.u32 %v999, 7
      %v1001 = vsub.s32 3, %v1000
      %v1002 = vrot.slane %v108, %v1001
      %vm1003 = vcmp.eq.s32.totalorder %v126, %v1002
      %vm1004 = vcmp.eq.s32.totalorder %v127, %v1002
      %vm1005 = vcmp.eq.s32.totalorder %v128, %v1002
      %vm1006 = vcmp.eq.s32.totalorder %v129, %v1002
      %v1007 = vsel %vm1003, 1, 0
      %v1008 = vsel %vm1004, 1, 0
      %v1009 = vsel %vm1005, 1, 0
      %v1010 = vsel %vm1006, 1, 0
      %v1011 = vcvt.s32.f32 %v1007
      %v1012 = vcvt.s32.f32 %v1008
      %v1013 = vcvt.s32.f32 %v1009
      %v1014 = vcvt.s32.f32 %v1010
      %v1015 = vld [vmem:[#allocation6 + $0x3] sm:$0x1]
      %v1016 = vld [vmem:[#allocation6 + $0xb] sm:$0x1]
      %v1017 = vld [vmem:[#allocation6 + $0x13] sm:$0x1]
      %v1018 = vld [vmem:[#allocation6 + $0x1b] sm:$0x1]
      %v1019 = vld [vmem:[#allocation6 + $0x23] sm:$0x1]
      %v1020 = vld [vmem:[#allocation6 + $0x2b] sm:$0x1]
      %v1021 = vld [vmem:[#allocation6 + $0x33] sm:$0x1]
      %v1022 = vld [vmem:[#allocation6 + $0x3b] sm:$0x1]
      %v1023 = vld [vmem:[#allocation6 + $0x43] sm:$0x1]
      %v1024 = vld [vmem:[#allocation6 + $0x4b] sm:$0x1]
      %v1025 = vld [vmem:[#allocation6 + $0x53] sm:$0x1]
      %v1026 = vld [vmem:[#allocation6 + $0x5b] sm:$0x1]
      %v1027 = vld [vmem:[#allocation6 + $0x63] sm:$0x1]
      %v1028 = vld [vmem:[#allocation6 + $0x6b] sm:$0x1]
      %v1029 = vld [vmem:[#allocation6 + $0x73] sm:$0x1]
      %v1030 = vld [vmem:[#allocation6 + $0x7b] sm:$0x1]
      %v1047 = vrot.slane %v1016, 7
      %v1048 = vsel %vm179, %v1047, %v1015
      %v1049 = vrot.slane %v1017, 6
      %v1050 = vsel %vm182, %v1049, %v1048
      %v1051 = vrot.slane %v1018, 5
      %v1052 = vsel %vm185, %v1051, %v1050
      %v1053 = vrot.slane %v1019, 4
      %v1054 = vsel %vm188, %v1053, %v1052
      %v1055 = vrot.slane %v1020, 3
      %v1056 = vsel %vm191, %v1055, %v1054
      %v1057 = vrot.slane %v1021, 2
      %v1058 = vsel %vm194, %v1057, %v1056
      %v1059 = vrot.slane %v1022, 1
      %v1060 = vsel %vm197, %v1059, %v1058
      %v1061 = vrot.slane %v1024, 7
      %v1062 = vsel %vm179, %v1061, %v1023
      %v1063 = vrot.slane %v1025, 6
      %v1064 = vsel %vm182, %v1063, %v1062
      %v1065 = vrot.slane %v1026, 5
      %v1066 = vsel %vm185, %v1065, %v1064
      %v1067 = vrot.slane %v1027, 4
      %v1068 = vsel %vm188, %v1067, %v1066
      %v1069 = vrot.slane %v1028, 3
      %v1070 = vsel %vm191, %v1069, %v1068
      %v1071 = vrot.slane %v1029, 2
      %v1072 = vsel %vm194, %v1071, %v1070
      %v1073 = vrot.slane %v1030, 1
      %v1074 = vsel %vm197, %v1073, %v1072
      %v1075 = vsel %vm213, %v1060, 0
      %v1077 = vsel %vm213, %v1074, 0
      %1079 = vmatprep.subr.mxu0 0.0
      %1080 = vmatpush1.msra.mxu0 %v1011
      %1081 = vmatprep.subr.mxu0 0.0
      %1082 = vmatpush1.msra.mxu0 %v1012
      %1083 = vmatprep.subr.mxu0 0.0
      %1084 = vmatpush1.msra.mxu0 %v1013
      %1085 = vmatprep.subr.mxu0 0.0
      %1086 = vmatpush1.msra.mxu0 %v1014
      %1087 = vmatprep.subr.mxu0 0.0
      %1088 = vmatpush1.msra.mxu0 0.0
      %1089 = vmatprep.subr.mxu0 0.0
      %1090 = vmatpush1.msra.mxu0 0.0
      %1091 = vmatprep.subr.mxu0 0.0
      %1092 = vmatpush1.msra.mxu0 0.0
      %1093 = vmatprep.subr.mxu0 0.0
      %1094 = vmatpush1.msra.mxu0 0.0
      %1095 = vmatprep.subr.mxu0 0.0
      %1096 = vmatpush1.msra.mxu0 0.0
      %1097 = vmatprep.subr.mxu0 0.0
      %1098 = vmatpush1.msra.mxu0 0.0
      %1099 = vmatprep.subr.mxu0 0.0
      %1100 = vmatpush1.msra.mxu0 0.0
      %1101 = vmatprep.subr.mxu0 0.0
      %1102 = vmatpush1.msra.mxu0 0.0
      %1103 = vmatprep.subr.mxu0 0.0
      %1104 = vmatpush1.msra.mxu0 0.0
      %1105 = vmatprep.subr.mxu0 0.0
      %1106 = vmatpush1.msra.mxu0 0.0
      %1107 = vmatprep.subr.mxu0 0.0
      %1108 = vmatpush1.msra.mxu0 0.0
      %1109 = vmatprep.subr.mxu0 0.0
      %1110 = vmatpush1.msra.mxu0 0.0
      %1111 = vmatprep.subr.mxu0 0.0
      %1112 = vmatpush1.msra.mxu0 0.0
      %1113 = vmatprep.subr.mxu0 0.0
      %1114 = vmatpush1.msra.mxu0 0.0
      %1115 = vmatprep.subr.mxu0 0.0
      %1116 = vmatpush1.msra.mxu0 0.0
      %1117 = vmatprep.subr.mxu0 0.0
      %1118 = vmatpush1.msra.mxu0 0.0
      %1119 = vmatprep.subr.mxu0 0.0
      %1120 = vmatpush1.msra.mxu0 0.0
      %1121 = vmatprep.subr.mxu0 0.0
      %1122 = vmatpush1.msra.mxu0 0.0
      %1123 = vmatprep.subr.mxu0 0.0
      %1124 = vmatpush1.msra.mxu0 0.0
      %1125 = vmatprep.subr.mxu0 0.0
      %1126 = vmatpush1.msra.mxu0 0.0
      %1127 = vmatprep.subr.mxu0 0.0
      %1128 = vmatpush1.msra.mxu0 0.0
      %1129 = vmatprep.subr.mxu0 0.0
      %1130 = vmatpush1.msra.mxu0 0.0
      %1131 = vmatprep.subr.mxu0 0.0
      %1132 = vmatpush1.msra.mxu0 0.0
      %1133 = vmatprep.subr.mxu0 0.0
      %1134 = vmatpush1.msra.mxu0 0.0
      %1135 = vmatprep.subr.mxu0 0.0
      %1136 = vmatpush1.msra.mxu0 0.0
      %1137 = vmatprep.subr.mxu0 0.0
      %1138 = vmatpush1.msra.mxu0 0.0
      %1139 = vmatprep.subr.mxu0 0.0
      %1140 = vmatpush1.msra.mxu0 0.0
      %1141 = vmatprep.subr.mxu0 0.0
      %1142 = vmatpush1.msra.mxu0 0.0
      %1143 = vmatprep.mubr.f32.mxu0 0.0
      %1144 = vmatmul.mubr.f32.gmra.mrb[0].mxu0 %v1075
      %v1145 = vpop.f32.mrb[0].mxu0
      %v1146 = vadd.f32 0.0, %v1145
      %v1147 = vpop.f32.mrb[0].mxu0
      %1148 = vmatprep.mubr.f32.mxu0 0.0
      %1149 = vmatmul.mubr.f32.gmra.mrb[0].mxu0 %v1077
      %v1150 = vpop.f32.mrb[0].mxu0
      %v1151 = vadd.f32 0.0, %v1150
      %v1152 = vpop.f32.mrb[0].mxu0
      %1153 = vdwg.mxu0
      %v1156 = vcombine.high %v1146, %v1146
      %v1158 = vunpack.c.l.s4 1966171168
      %v1159 = vunpack.c.0.s8 %v1158
      %v1160 = vlaneseq
      %v1161 = vshrl.u32 %v1160, 7
      %v1162 = vsub.s32 %v1159, %v1161
      %v1163 = vrot.slane %v1146, %v1162
      %v1165 = vunpack.c.l.s4 1966171168
      %v1166 = vunpack.c.0.s8 %v1165
      %v1167 = vlaneseq
      %v1168 = vshrl.u32 %v1167, 7
      %v1169 = vsub.s32 %v1166, %v1168
      %v1170 = vrot.slane %v1156, %v1169
      %v1171 = vcombine.high %v1163, %v1163
      %v1172 = vcombine.high %v1170, %v1170
      %v1174 = vunpack.c.l.s4 1966171168
      %v1175 = vunpack.c.0.s8 %v1174
      %v1176 = vlaneseq
      %v1177 = vshrl.u32 %v1176, 7
      %v1178 = vsub.s32 %v1175, %v1177
      %v1179 = vrot.slane %v1163, %v1178
      %v1181 = vunpack.c.l.s4 1966171168
      %v1182 = vunpack.c.0.s8 %v1181
      %v1183 = vlaneseq
      %v1184 = vshrl.u32 %v1183, 7
      %v1185 = vsub.s32 %v1182, %v1184
      %v1186 = vrot.slane %v1170, %v1185
      %v1188 = vunpack.c.l.s4 1966171168
      %v1189 = vunpack.c.0.s8 %v1188
      %v1190 = vlaneseq
      %v1191 = vshrl.u32 %v1190, 7
      %v1192 = vsub.s32 %v1189, %v1191
      %v1193 = vrot.slane %v1171, %v1192
      %v1195 = vunpack.c.l.s4 1966171168
      %v1196 = vunpack.c.0.s8 %v1195
      %v1197 = vlaneseq
      %v1198 = vshrl.u32 %v1197, 7
      %v1199 = vsub.s32 %v1196, %v1198
      %v1200 = vrot.slane %v1172, %v1199
      %v1201 = vcombine.high %v1179, %v1179
      %v1202 = vcombine.high %v1186, %v1186
      %v1203 = vcombine.high %v1193, %v1193
      %v1204 = vcombine.high %v1200, %v1200
      %v1205 = vcombine.high %v1151, %v1151
      %v1207 = vunpack.c.l.s4 1966171168
      %v1208 = vunpack.c.0.s8 %v1207
      %v1209 = vlaneseq
      %v1210 = vshrl.u32 %v1209, 7
      %v1211 = vsub.s32 %v1208, %v1210
      %v1212 = vrot.slane %v1151, %v1211
      %v1214 = vunpack.c.l.s4 1966171168
      %v1215 = vunpack.c.0.s8 %v1214
      %v1216 = vlaneseq
      %v1217 = vshrl.u32 %v1216, 7
      %v1218 = vsub.s32 %v1215, %v1217
      %v1219 = vrot.slane %v1205, %v1218
      %v1220 = vcombine.high %v1212, %v1212
      %v1221 = vcombine.high %v1219, %v1219
      %v1223 = vunpack.c.l.s4 1966171168
      %v1224 = vunpack.c.0.s8 %v1223
      %v1225 = vlaneseq
      %v1226 = vshrl.u32 %v1225, 7
      %v1227 = vsub.s32 %v1224, %v1226
      %v1228 = vrot.slane %v1212, %v1227
      %v1230 = vunpack.c.l.s4 1966171168
      %v1231 = vunpack.c.0.s8 %v1230
      %v1232 = vlaneseq
      %v1233 = vshrl.u32 %v1232, 7
      %v1234 = vsub.s32 %v1231, %v1233
      %v1235 = vrot.slane %v1219, %v1234
      %v1237 = vunpack.c.l.s4 1966171168
      %v1238 = vunpack.c.0.s8 %v1237
      %v1239 = vlaneseq
      %v1240 = vshrl.u32 %v1239, 7
      %v1241 = vsub.s32 %v1238, %v1240
      %v1242 = vrot.slane %v1220, %v1241
      %v1244 = vunpack.c.l.s4 1966171168
      %v1245 = vunpack.c.0.s8 %v1244
      %v1246 = vlaneseq
      %v1247 = vshrl.u32 %v1246, 7
      %v1248 = vsub.s32 %v1245, %v1247
      %v1249 = vrot.slane %v1221, %v1248
      %v1250 = vcombine.high %v1228, %v1228
      %v1251 = vcombine.high %v1235, %v1235
      %v1252 = vcombine.high %v1242, %v1242
      %v1253 = vcombine.high %v1249, %v1249
      %1270 = vst [vmem:[#allocation2 + $0x3] sm:$0x1] %v1179
      %1271 = vst [vmem:[#allocation2 + $0xb] sm:$0x1] %v1193
      %1272 = vst [vmem:[#allocation2 + $0x13] sm:$0x1] %v1201
      %1273 = vst [vmem:[#allocation2 + $0x1b] sm:$0x1] %v1203
      %1274 = vst [vmem:[#allocation2 + $0x23] sm:$0x1] %v1186
      %1275 = vst [vmem:[#allocation2 + $0x2b] sm:$0x1] %v1200
      %1276 = vst [vmem:[#allocation2 + $0x33] sm:$0x1] %v1202
      %1277 = vst [vmem:[#allocation2 + $0x3b] sm:$0x1] %v1204
      %1278 = vst [vmem:[#allocation2 + $0x43] sm:$0x1] %v1228
      %1279 = vst [vmem:[#allocation2 + $0x4b] sm:$0x1] %v1242
      %1280 = vst [vmem:[#allocation2 + $0x53] sm:$0x1] %v1250
      %1281 = vst [vmem:[#allocation2 + $0x5b] sm:$0x1] %v1252
      %1282 = vst [vmem:[#allocation2 + $0x63] sm:$0x1] %v1235
      %1283 = vst [vmem:[#allocation2 + $0x6b] sm:$0x1] %v1249
      %1284 = vst [vmem:[#allocation2 + $0x73] sm:$0x1] %v1251
      %1285 = vst [vmem:[#allocation2 + $0x7b] sm:$0x1] %v1253
      %v1286 = vlaneseq
      %v1287 = vshrl.u32 %v1286, 7
      %v1288 = vsub.s32 4, %v1287
      %v1289 = vrot.slane %v108, %v1288
      %vm1290 = vcmp.eq.s32.totalorder %v126, %v1289
      %vm1291 = vcmp.eq.s32.totalorder %v127, %v1289
      %vm1292 = vcmp.eq.s32.totalorder %v128, %v1289
      %vm1293 = vcmp.eq.s32.totalorder %v129, %v1289
      %v1294 = vsel %vm1290, 1, 0
      %v1295 = vsel %vm1291, 1, 0
      %v1296 = vsel %vm1292, 1, 0
      %v1297 = vsel %vm1293, 1, 0
      %v1298 = vcvt.s32.f32 %v1294
      %v1299 = vcvt.s32.f32 %v1295
      %v1300 = vcvt.s32.f32 %v1296
      %v1301 = vcvt.s32.f32 %v1297
      %v1302 = vld [vmem:[#allocation6 + $0x4] sm:$0x1]
      %v1303 = vld [vmem:[#allocation6 + $0xc] sm:$0x1]
      %v1304 = vld [vmem:[#allocation6 + $0x14] sm:$0x1]
      %v1305 = vld [vmem:[#allocation6 + $0x1c] sm:$0x1]
      %v1306 = vld [vmem:[#allocation6 + $0x24] sm:$0x1]
      %v1307 = vld [vmem:[#allocation6 + $0x2c] sm:$0x1]
      %v1308 = vld [vmem:[#allocation6 + $0x34] sm:$0x1]
      %v1309 = vld [vmem:[#allocation6 + $0x3c] sm:$0x1]
      %v1310 = vld [vmem:[#allocation6 + $0x44] sm:$0x1]
      %v1311 = vld [vmem:[#allocation6 + $0x4c] sm:$0x1]
      %v1312 = vld [vmem:[#allocation6 + $0x54] sm:$0x1]
      %v1313 = vld [vmem:[#allocation6 + $0x5c] sm:$0x1]
      %v1314 = vld [vmem:[#allocation6 + $0x64] sm:$0x1]
      %v1315 = vld [vmem:[#allocation6 + $0x6c] sm:$0x1]
      %v1316 = vld [vmem:[#allocation6 + $0x74] sm:$0x1]
      %v1317 = vld [vmem:[#allocation6 + $0x7c] sm:$0x1]
      %v1334 = vrot.slane %v1303, 7
      %v1335 = vsel %vm179, %v1334, %v1302
      %v1336 = vrot.slane %v1304, 6
      %v1337 = vsel %vm182, %v1336, %v1335
      %v1338 = vrot.slane %v1305, 5
      %v1339 = vsel %vm185, %v1338, %v1337
      %v1340 = vrot.slane %v1306, 4
      %v1341 = vsel %vm188, %v1340, %v1339
      %v1342 = vrot.slane %v1307, 3
      %v1343 = vsel %vm191, %v1342, %v1341
      %v1344 = vrot.slane %v1308, 2
      %v1345 = vsel %vm194, %v1344, %v1343
      %v1346 = vrot.slane %v1309, 1
      %v1347 = vsel %vm197, %v1346, %v1345
      %v1348 = vrot.slane %v1311, 7
      %v1349 = vsel %vm179, %v1348, %v1310
      %v1350 = vrot.slane %v1312, 6
      %v1351 = vsel %vm182, %v1350, %v1349
      %v1352 = vrot.slane %v1313, 5
      %v1353 = vsel %vm185, %v1352, %v1351
      %v1354 = vrot.slane %v1314, 4
      %v1355 = vsel %vm188, %v1354, %v1353
      %v1356 = vrot.slane %v1315, 3
      %v1357 = vsel %vm191, %v1356, %v1355
      %v1358 = vrot.slane %v1316, 2
      %v1359 = vsel %vm194, %v1358, %v1357
      %v1360 = vrot.slane %v1317, 1
      %v1361 = vsel %vm197, %v1360, %v1359
      %v1362 = vsel %vm213, %v1347, 0
      %v1364 = vsel %vm213, %v1361, 0
      %1366 = vmatprep.subr.mxu0 0.0
      %1367 = vmatpush1.msra.mxu0 %v1298
      %1368 = vmatprep.subr.mxu0 0.0
      %1369 = vmatpush1.msra.mxu0 %v1299
      %1370 = vmatprep.subr.mxu0 0.0
      %1371 = vmatpush1.msra.mxu0 %v1300
      %1372 = vmatprep.subr.mxu0 0.0
      %1373 = vmatpush1.msra.mxu0 %v1301
      %1374 = vmatprep.subr.mxu0 0.0
      %1375 = vmatpush1.msra.mxu0 0.0
      %1376 = vmatprep.subr.mxu0 0.0
      %1377 = vmatpush1.msra.mxu0 0.0
      %1378 = vmatprep.subr.mxu0 0.0
      %1379 = vmatpush1.msra.mxu0 0.0
      %1380 = vmatprep.subr.mxu0 0.0
      %1381 = vmatpush1.msra.mxu0 0.0
      %1382 = vmatprep.subr.mxu0 0.0
      %1383 = vmatpush1.msra.mxu0 0.0
      %1384 = vmatprep.subr.mxu0 0.0
      %1385 = vmatpush1.msra.mxu0 0.0
      %1386 = vmatprep.subr.mxu0 0.0
      %1387 = vmatpush1.msra.mxu0 0.0
      %1388 = vmatprep.subr.mxu0 0.0
      %1389 = vmatpush1.msra.mxu0 0.0
      %1390 = vmatprep.subr.mxu0 0.0
      %1391 = vmatpush1.msra.mxu0 0.0
      %1392 = vmatprep.subr.mxu0 0.0
      %1393 = vmatpush1.msra.mxu0 0.0
      %1394 = vmatprep.subr.mxu0 0.0
      %1395 = vmatpush1.msra.mxu0 0.0
      %1396 = vmatprep.subr.mxu0 0.0
      %1397 = vmatpush1.msra.mxu0 0.0
      %1398 = vmatprep.subr.mxu0 0.0
      %1399 = vmatpush1.msra.mxu0 0.0
      %1400 = vmatprep.subr.mxu0 0.0
      %1401 = vmatpush1.msra.mxu0 0.0
      %1402 = vmatprep.subr.mxu0 0.0
      %1403 = vmatpush1.msra.mxu0 0.0
      %1404 = vmatprep.subr.mxu0 0.0
      %1405 = vmatpush1.msra.mxu0 0.0
      %1406 = vmatprep.subr.mxu0 0.0
      %1407 = vmatpush1.msra.mxu0 0.0
      %1408 = vmatprep.subr.mxu0 0.0
      %1409 = vmatpush1.msra.mxu0 0.0
      %1410 = vmatprep.subr.mxu0 0.0
      %1411 = vmatpush1.msra.mxu0 0.0
      %1412 = vmatprep.subr.mxu0 0.0
      %1413 = vmatpush1.msra.mxu0 0.0
      %1414 = vmatprep.subr.mxu0 0.0
      %1415 = vmatpush1.msra.mxu0 0.0
      %1416 = vmatprep.subr.mxu0 0.0
      %1417 = vmatpush1.msra.mxu0 0.0
      %1418 = vmatprep.subr.mxu0 0.0
      %1419 = vmatpush1.msra.mxu0 0.0
      %1420 = vmatprep.subr.mxu0 0.0
      %1421 = vmatpush1.msra.mxu0 0.0
      %1422 = vmatprep.subr.mxu0 0.0
      %1423 = vmatpush1.msra.mxu0 0.0
      %1424 = vmatprep.subr.mxu0 0.0
      %1425 = vmatpush1.msra.mxu0 0.0
      %1426 = vmatprep.subr.mxu0 0.0
      %1427 = vmatpush1.msra.mxu0 0.0
      %1428 = vmatprep.subr.mxu0 0.0
      %1429 = vmatpush1.msra.mxu0 0.0
      %1430 = vmatprep.mubr.f32.mxu0 0.0
      %1431 = vmatmul.mubr.f32.gmra.mrb[0].mxu0 %v1362
      %v1432 = vpop.f32.mrb[0].mxu0
      %v1433 = vadd.f32 0.0, %v1432
      %v1434 = vpop.f32.mrb[0].mxu0
      %1435 = vmatprep.mubr.f32.mxu0 0.0
      %1436 = vmatmul.mubr.f32.gmra.mrb[0].mxu0 %v1364
      %v1437 = vpop.f32.mrb[0].mxu0
      %v1438 = vadd.f32 0.0, %v1437
      %v1439 = vpop.f32.mrb[0].mxu0
      %1440 = vdwg.mxu0
      %v1443 = vcombine.high %v1433, %v1433
      %v1445 = vunpack.c.l.s4 1966171168
      %v1446 = vunpack.c.0.s8 %v1445
      %v1447 = vlaneseq
      %v1448 = vshrl.u32 %v1447, 7
      %v1449 = vsub.s32 %v1446, %v1448
      %v1450 = vrot.slane %v1433, %v1449
      %v1452 = vunpack.c.l.s4 1966171168
      %v1453 = vunpack.c.0.s8 %v1452
      %v1454 = vlaneseq
      %v1455 = vshrl.u32 %v1454, 7
      %v1456 = vsub.s32 %v1453, %v1455
      %v1457 = vrot.slane %v1443, %v1456
      %v1458 = vcombine.high %v1450, %v1450
      %v1459 = vcombine.high %v1457, %v1457
      %v1461 = vunpack.c.l.s4 1966171168
      %v1462 = vunpack.c.0.s8 %v1461
      %v1463 = vlaneseq
      %v1464 = vshrl.u32 %v1463, 7
      %v1465 = vsub.s32 %v1462, %v1464
      %v1466 = vrot.slane %v1450, %v1465
      %v1468 = vunpack.c.l.s4 1966171168
      %v1469 = vunpack.c.0.s8 %v1468
      %v1470 = vlaneseq
      %v1471 = vshrl.u32 %v1470, 7
      %v1472 = vsub.s32 %v1469, %v1471
      %v1473 = vrot.slane %v1457, %v1472
      %v1475 = vunpack.c.l.s4 1966171168
      %v1476 = vunpack.c.0.s8 %v1475
      %v1477 = vlaneseq
      %v1478 = vshrl.u32 %v1477, 7
      %v1479 = vsub.s32 %v1476, %v1478
      %v1480 = vrot.slane %v1458, %v1479
      %v1482 = vunpack.c.l.s4 1966171168
      %v1483 = vunpack.c.0.s8 %v1482
      %v1484 = vlaneseq
      %v1485 = vshrl.u32 %v1484, 7
      %v1486 = vsub.s32 %v1483, %v1485
      %v1487 = vrot.slane %v1459, %v1486
      %v1488 = vcombine.high %v1466, %v1466
      %v1489 = vcombine.high %v1473, %v1473
      %v1490 = vcombine.high %v1480, %v1480
      %v1491 = vcombine.high %v1487, %v1487
      %v1492 = vcombine.high %v1438, %v1438
      %v1494 = vunpack.c.l.s4 1966171168
      %v1495 = vunpack.c.0.s8 %v1494
      %v1496 = vlaneseq
      %v1497 = vshrl.u32 %v1496, 7
      %v1498 = vsub.s32 %v1495, %v1497
      %v1499 = vrot.slane %v1438, %v1498
      %v1501 = vunpack.c.l.s4 1966171168
      %v1502 = vunpack.c.0.s8 %v1501
      %v1503 = vlaneseq
      %v1504 = vshrl.u32 %v1503, 7
      %v1505 = vsub.s32 %v1502, %v1504
      %v1506 = vrot.slane %v1492, %v1505
      %v1507 = vcombine.high %v1499, %v1499
      %v1508 = vcombine.high %v1506, %v1506
      %v1510 = vunpack.c.l.s4 1966171168
      %v1511 = vunpack.c.0.s8 %v1510
      %v1512 = vlaneseq
      %v1513 = vshrl.u32 %v1512, 7
      %v1514 = vsub.s32 %v1511, %v1513
      %v1515 = vrot.slane %v1499, %v1514
      %v1517 = vunpack.c.l.s4 1966171168
      %v1518 = vunpack.c.0.s8 %v1517
      %v1519 = vlaneseq
      %v1520 = vshrl.u32 %v1519, 7
      %v1521 = vsub.s32 %v1518, %v1520
      %v1522 = vrot.slane %v1506, %v1521
      %v1524 = vunpack.c.l.s4 1966171168
      %v1525 = vunpack.c.0.s8 %v1524
      %v1526 = vlaneseq
      %v1527 = vshrl.u32 %v1526, 7
      %v1528 = vsub.s32 %v1525, %v1527
      %v1529 = vrot.slane %v1507, %v1528
      %v1531 = vunpack.c.l.s4 1966171168
      %v1532 = vunpack.c.0.s8 %v1531
      %v1533 = vlaneseq
      %v1534 = vshrl.u32 %v1533, 7
      %v1535 = vsub.s32 %v1532, %v1534
      %v1536 = vrot.slane %v1508, %v1535
      %v1537 = vcombine.high %v1515, %v1515
      %v1538 = vcombine.high %v1522, %v1522
      %v1539 = vcombine.high %v1529, %v1529
      %v1540 = vcombine.high %v1536, %v1536
      %1557 = vst [vmem:[#allocation2 + $0x4] sm:$0x1] %v1466
      %1558 = vst [vmem:[#allocation2 + $0xc] sm:$0x1] %v1480
      %1559 = vst [vmem:[#allocation2 + $0x14] sm:$0x1] %v1488
      %1560 = vst [vmem:[#allocation2 + $0x1c] sm:$0x1] %v1490
      %1561 = vst [vmem:[#allocation2 + $0x24] sm:$0x1] %v1473
      %1562 = vst [vmem:[#allocation2 + $0x2c] sm:$0x1] %v1487
      %1563 = vst [vmem:[#allocation2 + $0x34] sm:$0x1] %v1489
      %1564 = vst [vmem:[#allocation2 + $0x3c] sm:$0x1] %v1491
      %1565 = vst [vmem:[#allocation2 + $0x44] sm:$0x1] %v1515
      %1566 = vst [vmem:[#allocation2 + $0x4c] sm:$0x1] %v1529
      %1567 = vst [vmem:[#allocation2 + $0x54] sm:$0x1] %v1537
      %1568 = vst [vmem:[#allocation2 + $0x5c] sm:$0x1] %v1539
      %1569 = vst [vmem:[#allocation2 + $0x64] sm:$0x1] %v1522
      %1570 = vst [vmem:[#allocation2 + $0x6c] sm:$0x1] %v1536
      %1571 = vst [vmem:[#allocation2 + $0x74] sm:$0x1] %v1538
      %1572 = vst [vmem:[#allocation2 + $0x7c] sm:$0x1] %v1540
      %v1573 = vlaneseq
      %v1574 = vshrl.u32 %v1573, 7
      %v1575 = vsub.s32 5, %v1574
      %v1576 = vrot.slane %v108, %v1575
      %vm1577 = vcmp.eq.s32.totalorder %v126, %v1576
      %vm1578 = vcmp.eq.s32.totalorder %v127, %v1576
      %vm1579 = vcmp.eq.s32.totalorder %v128, %v1576
      %vm1580 = vcmp.eq.s32.totalorder %v129, %v1576
      %v1581 = vsel %vm1577, 1, 0
      %v1582 = vsel %vm1578, 1, 0
      %v1583 = vsel %vm1579, 1, 0
      %v1584 = vsel %vm1580, 1, 0
      %v1585 = vcvt.s32.f32 %v1581
      %v1586 = vcvt.s32.f32 %v1582
      %v1587 = vcvt.s32.f32 %v1583
      %v1588 = vcvt.s32.f32 %v1584
      %v1589 = vld [vmem:[#allocation6 + $0x5] sm:$0x1]
      %v1590 = vld [vmem:[#allocation6 + $0xd] sm:$0x1]
      %v1591 = vld [vmem:[#allocation6 + $0x15] sm:$0x1]
      %v1592 = vld [vmem:[#allocation6 + $0x1d] sm:$0x1]
      %v1593 = vld [vmem:[#allocation6 + $0x25] sm:$0x1]
      %v1594 = vld [vmem:[#allocation6 + $0x2d] sm:$0x1]
      %v1595 = vld [vmem:[#allocation6 + $0x35] sm:$0x1]
      %v1596 = vld [vmem:[#allocation6 + $0x3d] sm:$0x1]
      %v1597 = vld [vmem:[#allocation6 + $0x45] sm:$0x1]
      %v1598 = vld [vmem:[#allocation6 + $0x4d] sm:$0x1]
      %v1599 = vld [vmem:[#allocation6 + $0x55] sm:$0x1]
      %v1600 = vld [vmem:[#allocation6 + $0x5d] sm:$0x1]
      %v1601 = vld [vmem:[#allocation6 + $0x65] sm:$0x1]
      %v1602 = vld [vmem:[#allocation6 + $0x6d] sm:$0x1]
      %v1603 = vld [vmem:[#allocation6 + $0x75] sm:$0x1]
      %v1604 = vld [vmem:[#allocation6 + $0x7d] sm:$0x1]
      %v1621 = vrot.slane %v1590, 7
      %v1622 = vsel %vm179, %v1621, %v1589
      %v1623 = vrot.slane %v1591, 6
      %v1624 = vsel %vm182, %v1623, %v1622
      %v1625 = vrot.slane %v1592, 5
      %v1626 = vsel %vm185, %v1625, %v1624
      %v1627 = vrot.slane %v1593, 4
      %v1628 = vsel %vm188, %v1627, %v1626
      %v1629 = vrot.slane %v1594, 3
      %v1630 = vsel %vm191, %v1629, %v1628
      %v1631 = vrot.slane %v1595, 2
      %v1632 = vsel %vm194, %v1631, %v1630
      %v1633 = vrot.slane %v1596, 1
      %v1634 = vsel %vm197, %v1633, %v1632
      %v1635 = vrot.slane %v1598, 7
      %v1636 = vsel %vm179, %v1635, %v1597
      %v1637 = vrot.slane %v1599, 6
      %v1638 = vsel %vm182, %v1637, %v1636
      %v1639 = vrot.slane %v1600, 5
      %v1640 = vsel %vm185, %v1639, %v1638
      %v1641 = vrot.slane %v1601, 4
      %v1642 = vsel %vm188, %v1641, %v1640
      %v1643 = vrot.slane %v1602, 3
      %v1644 = vsel %vm191, %v1643, %v1642
      %v1645 = vrot.slane %v1603, 2
      %v1646 = vsel %vm194, %v1645, %v1644
      %v1647 = vrot.slane %v1604, 1
      %v1648 = vsel %vm197, %v1647, %v1646
      %v1649 = vsel %vm213, %v1634, 0
      %v1651 = vsel %vm213, %v1648, 0
      %1653 = vmatprep.subr.mxu0 0.0
      %1654 = vmatpush1.msra.mxu0 %v1585
      %1655 = vmatprep.subr.mxu0 0.0
      %1656 = vmatpush1.msra.mxu0 %v1586
      %1657 = vmatprep.subr.mxu0 0.0
      %1658 = vmatpush1.msra.mxu0 %v1587
      %1659 = vmatprep.subr.mxu0 0.0
      %1660 = vmatpush1.msra.mxu0 %v1588
      %1661 = vmatprep.subr.mxu0 0.0
      %1662 = vmatpush1.msra.mxu0 0.0
      %1663 = vmatprep.subr.mxu0 0.0
      %1664 = vmatpush1.msra.mxu0 0.0
      %1665 = vmatprep.subr.mxu0 0.0
      %1666 = vmatpush1.msra.mxu0 0.0
      %1667 = vmatprep.subr.mxu0 0.0
      %1668 = vmatpush1.msra.mxu0 0.0
      %1669 = vmatprep.subr.mxu0 0.0
      %1670 = vmatpush1.msra.mxu0 0.0
      %1671 = vmatprep.subr.mxu0 0.0
      %1672 = vmatpush1.msra.mxu0 0.0
      %1673 = vmatprep.subr.mxu0 0.0
      %1674 = vmatpush1.msra.mxu0 0.0
      %1675 = vmatprep.subr.mxu0 0.0
      %1676 = vmatpush1.msra.mxu0 0.0
      %1677 = vmatprep.subr.mxu0 0.0
      %1678 = vmatpush1.msra.mxu0 0.0
      %1679 = vmatprep.subr.mxu0 0.0
      %1680 = vmatpush1.msra.mxu0 0.0
      %1681 = vmatprep.subr.mxu0 0.0
      %1682 = vmatpush1.msra.mxu0 0.0
      %1683 = vmatprep.subr.mxu0 0.0
      %1684 = vmatpush1.msra.mxu0 0.0
      %1685 = vmatprep.subr.mxu0 0.0
      %1686 = vmatpush1.msra.mxu0 0.0
      %1687 = vmatprep.subr.mxu0 0.0
      %1688 = vmatpush1.msra.mxu0 0.0
      %1689 = vmatprep.subr.mxu0 0.0
      %1690 = vmatpush1.msra.mxu0 0.0
      %1691 = vmatprep.subr.mxu0 0.0
      %1692 = vmatpush1.msra.mxu0 0.0
      %1693 = vmatprep.subr.mxu0 0.0
      %1694 = vmatpush1.msra.mxu0 0.0
      %1695 = vmatprep.subr.mxu0 0.0
      %1696 = vmatpush1.msra.mxu0 0.0
      %1697 = vmatprep.subr.mxu0 0.0
      %1698 = vmatpush1.msra.mxu0 0.0
      %1699 = vmatprep.subr.mxu0 0.0
      %1700 = vmatpush1.msra.mxu0 0.0
      %1701 = vmatprep.subr.mxu0 0.0
      %1702 = vmatpush1.msra.mxu0 0.0
      %1703 = vmatprep.subr.mxu0 0.0
      %1704 = vmatpush1.msra.mxu0 0.0
      %1705 = vmatprep.subr.mxu0 0.0
      %1706 = vmatpush1.msra.mxu0 0.0
      %1707 = vmatprep.subr.mxu0 0.0
      %1708 = vmatpush1.msra.mxu0 0.0
      %1709 = vmatprep.subr.mxu0 0.0
      %1710 = vmatpush1.msra.mxu0 0.0
      %1711 = vmatprep.subr.mxu0 0.0
      %1712 = vmatpush1.msra.mxu0 0.0
      %1713 = vmatprep.subr.mxu0 0.0
      %1714 = vmatpush1.msra.mxu0 0.0
      %1715 = vmatprep.subr.mxu0 0.0
      %1716 = vmatpush1.msra.mxu0 0.0
      %1717 = vmatprep.mubr.f32.mxu0 0.0
      %1718 = vmatmul.mubr.f32.gmra.mrb[0].mxu0 %v1649
      %v1719 = vpop.f32.mrb[0].mxu0
      %v1720 = vadd.f32 0.0, %v1719
      %v1721 = vpop.f32.mrb[0].mxu0
      %1722 = vmatprep.mubr.f32.mxu0 0.0
      %1723 = vmatmul.mubr.f32.gmra.mrb[0].mxu0 %v1651
      %v1724 = vpop.f32.mrb[0].mxu0
      %v1725 = vadd.f32 0.0, %v1724
      %v1726 = vpop.f32.mrb[0].mxu0
      %1727 = vdwg.mxu0
      %v1730 = vcombine.high %v1720, %v1720
      %v1732 = vunpack.c.l.s4 1966171168
      %v1733 = vunpack.c.0.s8 %v1732
      %v1734 = vlaneseq
      %v1735 = vshrl.u32 %v1734, 7
      %v1736 = vsub.s32 %v1733, %v1735
      %v1737 = vrot.slane %v1720, %v1736
      %v1739 = vunpack.c.l.s4 1966171168
      %v1740 = vunpack.c.0.s8 %v1739
      %v1741 = vlaneseq
      %v1742 = vshrl.u32 %v1741, 7
      %v1743 = vsub.s32 %v1740, %v1742
      %v1744 = vrot.slane %v1730, %v1743
      %v1745 = vcombine.high %v1737, %v1737
      %v1746 = vcombine.high %v1744, %v1744
      %v1748 = vunpack.c.l.s4 1966171168
      %v1749 = vunpack.c.0.s8 %v1748
      %v1750 = vlaneseq
      %v1751 = vshrl.u32 %v1750, 7
      %v1752 = vsub.s32 %v1749, %v1751
      %v1753 = vrot.slane %v1737, %v1752
      %v1755 = vunpack.c.l.s4 1966171168
      %v1756 = vunpack.c.0.s8 %v1755
      %v1757 = vlaneseq
      %v1758 = vshrl.u32 %v1757, 7
      %v1759 = vsub.s32 %v1756, %v1758
      %v1760 = vrot.slane %v1744, %v1759
      %v1762 = vunpack.c.l.s4 1966171168
      %v1763 = vunpack.c.0.s8 %v1762
      %v1764 = vlaneseq
      %v1765 = vshrl.u32 %v1764, 7
      %v1766 = vsub.s32 %v1763, %v1765
      %v1767 = vrot.slane %v1745, %v1766
      %v1769 = vunpack.c.l.s4 1966171168
      %v1770 = vunpack.c.0.s8 %v1769
      %v1771 = vlaneseq
      %v1772 = vshrl.u32 %v1771, 7
      %v1773 = vsub.s32 %v1770, %v1772
      %v1774 = vrot.slane %v1746, %v1773
      %v1775 = vcombine.high %v1753, %v1753
      %v1776 = vcombine.high %v1760, %v1760
      %v1777 = vcombine.high %v1767, %v1767
      %v1778 = vcombine.high %v1774, %v1774
      %v1779 = vcombine.high %v1725, %v1725
      %v1781 = vunpack.c.l.s4 1966171168
      %v1782 = vunpack.c.0.s8 %v1781
      %v1783 = vlaneseq
      %v1784 = vshrl.u32 %v1783, 7
      %v1785 = vsub.s32 %v1782, %v1784
      %v1786 = vrot.slane %v1725, %v1785
      %v1788 = vunpack.c.l.s4 1966171168
      %v1789 = vunpack.c.0.s8 %v1788
      %v1790 = vlaneseq
      %v1791 = vshrl.u32 %v1790, 7
      %v1792 = vsub.s32 %v1789, %v1791
      %v1793 = vrot.slane %v1779, %v1792
      %v1794 = vcombine.high %v1786, %v1786
      %v1795 = vcombine.high %v1793, %v1793
      %v1797 = vunpack.c.l.s4 1966171168
      %v1798 = vunpack.c.0.s8 %v1797
      %v1799 = vlaneseq
      %v1800 = vshrl.u32 %v1799, 7
      %v1801 = vsub.s32 %v1798, %v1800
      %v1802 = vrot.slane %v1786, %v1801
      %v1804 = vunpack.c.l.s4 1966171168
      %v1805 = vunpack.c.0.s8 %v1804
      %v1806 = vlaneseq
      %v1807 = vshrl.u32 %v1806, 7
      %v1808 = vsub.s32 %v1805, %v1807
      %v1809 = vrot.slane %v1793, %v1808
      %v1811 = vunpack.c.l.s4 1966171168
      %v1812 = vunpack.c.0.s8 %v1811
      %v1813 = vlaneseq
      %v1814 = vshrl.u32 %v1813, 7
      %v1815 = vsub.s32 %v1812, %v1814
      %v1816 = vrot.slane %v1794, %v1815
      %v1818 = vunpack.c.l.s4 1966171168
      %v1819 = vunpack.c.0.s8 %v1818
      %v1820 = vlaneseq
      %v1821 = vshrl.u32 %v1820, 7
      %v1822 = vsub.s32 %v1819, %v1821
      %v1823 = vrot.slane %v1795, %v1822
      %v1824 = vcombine.high %v1802, %v1802
      %v1825 = vcombine.high %v1809, %v1809
      %v1826 = vcombine.high %v1816, %v1816
      %v1827 = vcombine.high %v1823, %v1823
      %1844 = vst [vmem:[#allocation2 + $0x5] sm:$0x1] %v1753
      %1845 = vst [vmem:[#allocation2 + $0xd] sm:$0x1] %v1767
      %1846 = vst [vmem:[#allocation2 + $0x15] sm:$0x1] %v1775
      %1847 = vst [vmem:[#allocation2 + $0x1d] sm:$0x1] %v1777
      %1848 = vst [vmem:[#allocation2 + $0x25] sm:$0x1] %v1760
      %1849 = vst [vmem:[#allocation2 + $0x2d] sm:$0x1] %v1774
      %1850 = vst [vmem:[#allocation2 + $0x35] sm:$0x1] %v1776
      %1851 = vst [vmem:[#allocation2 + $0x3d] sm:$0x1] %v1778
      %1852 = vst [vmem:[#allocation2 + $0x45] sm:$0x1] %v1802
      %1853 = vst [vmem:[#allocation2 + $0x4d] sm:$0x1] %v1816
      %1854 = vst [vmem:[#allocation2 + $0x55] sm:$0x1] %v1824
      %1855 = vst [vmem:[#allocation2 + $0x5d] sm:$0x1] %v1826
      %1856 = vst [vmem:[#allocation2 + $0x65] sm:$0x1] %v1809
      %1857 = vst [vmem:[#allocation2 + $0x6d] sm:$0x1] %v1823
      %1858 = vst [vmem:[#allocation2 + $0x75] sm:$0x1] %v1825
      %1859 = vst [vmem:[#allocation2 + $0x7d] sm:$0x1] %v1827
      %v1860 = vlaneseq
      %v1861 = vshrl.u32 %v1860, 7
      %v1862 = vsub.s32 6, %v1861
      %v1863 = vrot.slane %v108, %v1862
      %vm1864 = vcmp.eq.s32.totalorder %v126, %v1863
      %vm1865 = vcmp.eq.s32.totalorder %v127, %v1863
      %vm1866 = vcmp.eq.s32.totalorder %v128, %v1863
      %vm1867 = vcmp.eq.s32.totalorder %v129, %v1863
      %v1868 = vsel %vm1864, 1, 0
      %v1869 = vsel %vm1865, 1, 0
      %v1870 = vsel %vm1866, 1, 0
      %v1871 = vsel %vm1867, 1, 0
      %v1872 = vcvt.s32.f32 %v1868
      %v1873 = vcvt.s32.f32 %v1869
      %v1874 = vcvt.s32.f32 %v1870
      %v1875 = vcvt.s32.f32 %v1871
      %v1876 = vld [vmem:[#allocation6 + $0x6] sm:$0x1]
      %v1877 = vld [vmem:[#allocation6 + $0xe] sm:$0x1]
      %v1878 = vld [vmem:[#allocation6 + $0x16] sm:$0x1]
      %v1879 = vld [vmem:[#allocation6 + $0x1e] sm:$0x1]
      %v1880 = vld [vmem:[#allocation6 + $0x26] sm:$0x1]
      %v1881 = vld [vmem:[#allocation6 + $0x2e] sm:$0x1]
      %v1882 = vld [vmem:[#allocation6 + $0x36] sm:$0x1]
      %v1883 = vld [vmem:[#allocation6 + $0x3e] sm:$0x1]
      %v1884 = vld [vmem:[#allocation6 + $0x46] sm:$0x1]
      %v1885 = vld [vmem:[#allocation6 + $0x4e] sm:$0x1]
      %v1886 = vld [vmem:[#allocation6 + $0x56] sm:$0x1]
      %v1887 = vld [vmem:[#allocation6 + $0x5e] sm:$0x1]
      %v1888 = vld [vmem:[#allocation6 + $0x66] sm:$0x1]
      %v1889 = vld [vmem:[#allocation6 + $0x6e] sm:$0x1]
      %v1890 = vld [vmem:[#allocation6 + $0x76] sm:$0x1]
      %v1891 = vld [vmem:[#allocation6 + $0x7e] sm:$0x1]
      %v1908 = vrot.slane %v1877, 7
      %v1909 = vsel %vm179, %v1908, %v1876
      %v1910 = vrot.slane %v1878, 6
      %v1911 = vsel %vm182, %v1910, %v1909
      %v1912 = vrot.slane %v1879, 5
      %v1913 = vsel %vm185, %v1912, %v1911
      %v1914 = vrot.slane %v1880, 4
      %v1915 = vsel %vm188, %v1914, %v1913
      %v1916 = vrot.slane %v1881, 3
      %v1917 = vsel %vm191, %v1916, %v1915
      %v1918 = vrot.slane %v1882, 2
      %v1919 = vsel %vm194, %v1918, %v1917
      %v1920 = vrot.slane %v1883, 1
      %v1921 = vsel %vm197, %v1920, %v1919
      %v1922 = vrot.slane %v1885, 7
      %v1923 = vsel %vm179, %v1922, %v1884
      %v1924 = vrot.slane %v1886, 6
      %v1925 = vsel %vm182, %v1924, %v1923
      %v1926 = vrot.slane %v1887, 5
      %v1927 = vsel %vm185, %v1926, %v1925
      %v1928 = vrot.slane %v1888, 4
      %v1929 = vsel %vm188, %v1928, %v1927
      %v1930 = vrot.slane %v1889, 3
      %v1931 = vsel %vm191, %v1930, %v1929
      %v1932 = vrot.slane %v1890, 2
      %v1933 = vsel %vm194, %v1932, %v1931
      %v1934 = vrot.slane %v1891, 1
      %v1935 = vsel %vm197, %v1934, %v1933
      %v1936 = vsel %vm213, %v1921, 0
      %v1938 = vsel %vm213, %v1935, 0
      %1940 = vmatprep.subr.mxu0 0.0
      %1941 = vmatpush1.msra.mxu0 %v1872
      %1942 = vmatprep.subr.mxu0 0.0
      %1943 = vmatpush1.msra.mxu0 %v1873
      %1944 = vmatprep.subr.mxu0 0.0
      %1945 = vmatpush1.msra.mxu0 %v1874
      %1946 = vmatprep.subr.mxu0 0.0
      %1947 = vmatpush1.msra.mxu0 %v1875
      %1948 = vmatprep.subr.mxu0 0.0
      %1949 = vmatpush1.msra.mxu0 0.0
      %1950 = vmatprep.subr.mxu0 0.0
      %1951 = vmatpush1.msra.mxu0 0.0
      %1952 = vmatprep.subr.mxu0 0.0
      %1953 = vmatpush1.msra.mxu0 0.0
      %1954 = vmatprep.subr.mxu0 0.0
      %1955 = vmatpush1.msra.mxu0 0.0
      %1956 = vmatprep.subr.mxu0 0.0
      %1957 = vmatpush1.msra.mxu0 0.0
      %1958 = vmatprep.subr.mxu0 0.0
      %1959 = vmatpush1.msra.mxu0 0.0
      %1960 = vmatprep.subr.mxu0 0.0
      %1961 = vmatpush1.msra.mxu0 0.0
      %1962 = vmatprep.subr.mxu0 0.0
      %1963 = vmatpush1.msra.mxu0 0.0
      %1964 = vmatprep.subr.mxu0 0.0
      %1965 = vmatpush1.msra.mxu0 0.0
      %1966 = vmatprep.subr.mxu0 0.0
      %1967 = vmatpush1.msra.mxu0 0.0
      %1968 = vmatprep.subr.mxu0 0.0
      %1969 = vmatpush1.msra.mxu0 0.0
      %1970 = vmatprep.subr.mxu0 0.0
      %1971 = vmatpush1.msra.mxu0 0.0
      %1972 = vmatprep.subr.mxu0 0.0
      %1973 = vmatpush1.msra.mxu0 0.0
      %1974 = vmatprep.subr.mxu0 0.0
      %1975 = vmatpush1.msra.mxu0 0.0
      %1976 = vmatprep.subr.mxu0 0.0
      %1977 = vmatpush1.msra.mxu0 0.0
      %1978 = vmatprep.subr.mxu0 0.0
      %1979 = vmatpush1.msra.mxu0 0.0
      %1980 = vmatprep.subr.mxu0 0.0
      %1981 = vmatpush1.msra.mxu0 0.0
      %1982 = vmatprep.subr.mxu0 0.0
      %1983 = vmatpush1.msra.mxu0 0.0
      %1984 = vmatprep.subr.mxu0 0.0
      %1985 = vmatpush1.msra.mxu0 0.0
      %1986 = vmatprep.subr.mxu0 0.0
      %1987 = vmatpush1.msra.mxu0 0.0
      %1988 = vmatprep.subr.mxu0 0.0
      %1989 = vmatpush1.msra.mxu0 0.0
      %1990 = vmatprep.subr.mxu0 0.0
      %1991 = vmatpush1.msra.mxu0 0.0
      %1992 = vmatprep.subr.mxu0 0.0
      %1993 = vmatpush1.msra.mxu0 0.0
      %1994 = vmatprep.subr.mxu0 0.0
      %1995 = vmatpush1.msra.mxu0 0.0
      %1996 = vmatprep.subr.mxu0 0.0
      %1997 = vmatpush1.msra.mxu0 0.0
      %1998 = vmatprep.subr.mxu0 0.0
      %1999 = vmatpush1.msra.mxu0 0.0
      %2000 = vmatprep.subr.mxu0 0.0
      %2001 = vmatpush1.msra.mxu0 0.0
      %2002 = vmatprep.subr.mxu0 0.0
      %2003 = vmatpush1.msra.mxu0 0.0
      %2004 = vmatprep.mubr.f32.mxu0 0.0
      %2005 = vmatmul.mubr.f32.gmra.mrb[0].mxu0 %v1936
      %v2006 = vpop.f32.mrb[0].mxu0
      %v2007 = vadd.f32 0.0, %v2006
      %v2008 = vpop.f32.mrb[0].mxu0
      %2009 = vmatprep.mubr.f32.mxu0 0.0
      %2010 = vmatmul.mubr.f32.gmra.mrb[0].mxu0 %v1938
      %v2011 = vpop.f32.mrb[0].mxu0
      %v2012 = vadd.f32 0.0, %v2011
      %v2013 = vpop.f32.mrb[0].mxu0
      %2014 = vdwg.mxu0
      %v2017 = vcombine.high %v2007, %v2007
      %v2019 = vunpack.c.l.s4 1966171168
      %v2020 = vunpack.c.0.s8 %v2019
      %v2021 = vlaneseq
      %v2022 = vshrl.u32 %v2021, 7
      %v2023 = vsub.s32 %v2020, %v2022
      %v2024 = vrot.slane %v2007, %v2023
      %v2026 = vunpack.c.l.s4 1966171168
      %v2027 = vunpack.c.0.s8 %v2026
      %v2028 = vlaneseq
      %v2029 = vshrl.u32 %v2028, 7
      %v2030 = vsub.s32 %v2027, %v2029
      %v2031 = vrot.slane %v2017, %v2030
      %v2032 = vcombine.high %v2024, %v2024
      %v2033 = vcombine.high %v2031, %v2031
      %v2035 = vunpack.c.l.s4 1966171168
      %v2036 = vunpack.c.0.s8 %v2035
      %v2037 = vlaneseq
      %v2038 = vshrl.u32 %v2037, 7
      %v2039 = vsub.s32 %v2036, %v2038
      %v2040 = vrot.slane %v2024, %v2039
      %v2042 = vunpack.c.l.s4 1966171168
      %v2043 = vunpack.c.0.s8 %v2042
      %v2044 = vlaneseq
      %v2045 = vshrl.u32 %v2044, 7
      %v2046 = vsub.s32 %v2043, %v2045
      %v2047 = vrot.slane %v2031, %v2046
      %v2049 = vunpack.c.l.s4 1966171168
      %v2050 = vunpack.c.0.s8 %v2049
      %v2051 = vlaneseq
      %v2052 = vshrl.u32 %v2051, 7
      %v2053 = vsub.s32 %v2050, %v2052
      %v2054 = vrot.slane %v2032, %v2053
      %v2056 = vunpack.c.l.s4 1966171168
      %v2057 = vunpack.c.0.s8 %v2056
      %v2058 = vlaneseq
      %v2059 = vshrl.u32 %v2058, 7
      %v2060 = vsub.s32 %v2057, %v2059
      %v2061 = vrot.slane %v2033, %v2060
      %v2062 = vcombine.high %v2040, %v2040
      %v2063 = vcombine.high %v2047, %v2047
      %v2064 = vcombine.high %v2054, %v2054
      %v2065 = vcombine.high %v2061, %v2061
      %v2066 = vcombine.high %v2012, %v2012
      %v2068 = vunpack.c.l.s4 1966171168
      %v2069 = vunpack.c.0.s8 %v2068
      %v2070 = vlaneseq
      %v2071 = vshrl.u32 %v2070, 7
      %v2072 = vsub.s32 %v2069, %v2071
      %v2073 = vrot.slane %v2012, %v2072
      %v2075 = vunpack.c.l.s4 1966171168
      %v2076 = vunpack.c.0.s8 %v2075
      %v2077 = vlaneseq
      %v2078 = vshrl.u32 %v2077, 7
      %v2079 = vsub.s32 %v2076, %v2078
      %v2080 = vrot.slane %v2066, %v2079
      %v2081 = vcombine.high %v2073, %v2073
      %v2082 = vcombine.high %v2080, %v2080
      %v2084 = vunpack.c.l.s4 1966171168
      %v2085 = vunpack.c.0.s8 %v2084
      %v2086 = vlaneseq
      %v2087 = vshrl.u32 %v2086, 7
      %v2088 = vsub.s32 %v2085, %v2087
      %v2089 = vrot.slane %v2073, %v2088
      %v2091 = vunpack.c.l.s4 1966171168
      %v2092 = vunpack.c.0.s8 %v2091
      %v2093 = vlaneseq
      %v2094 = vshrl.u32 %v2093, 7
      %v2095 = vsub.s32 %v2092, %v2094
      %v2096 = vrot.slane %v2080, %v2095
      %v2098 = vunpack.c.l.s4 1966171168
      %v2099 = vunpack.c.0.s8 %v2098
      %v2100 = vlaneseq
      %v2101 = vshrl.u32 %v2100, 7
      %v2102 = vsub.s32 %v2099, %v2101
      %v2103 = vrot.slane %v2081, %v2102
      %v2105 = vunpack.c.l.s4 1966171168
      %v2106 = vunpack.c.0.s8 %v2105
      %v2107 = vlaneseq
      %v2108 = vshrl.u32 %v2107, 7
      %v2109 = vsub.s32 %v2106, %v2108
      %v2110 = vrot.slane %v2082, %v2109
      %v2111 = vcombine.high %v2089, %v2089
      %v2112 = vcombine.high %v2096, %v2096
      %v2113 = vcombine.high %v2103, %v2103
      %v2114 = vcombine.high %v2110, %v2110
      %2131 = vst [vmem:[#allocation2 + $0x6] sm:$0x1] %v2040
      %2132 = vst [vmem:[#allocation2 + $0xe] sm:$0x1] %v2054
      %2133 = vst [vmem:[#allocation2 + $0x16] sm:$0x1] %v2062
      %2134 = vst [vmem:[#allocation2 + $0x1e] sm:$0x1] %v2064
      %2135 = vst [vmem:[#allocation2 + $0x26] sm:$0x1] %v2047
      %2136 = vst [vmem:[#allocation2 + $0x2e] sm:$0x1] %v2061
      %2137 = vst [vmem:[#allocation2 + $0x36] sm:$0x1] %v2063
      %2138 = vst [vmem:[#allocation2 + $0x3e] sm:$0x1] %v2065
      %2139 = vst [vmem:[#allocation2 + $0x46] sm:$0x1] %v2089
      %2140 = vst [vmem:[#allocation2 + $0x4e] sm:$0x1] %v2103
      %2141 = vst [vmem:[#allocation2 + $0x56] sm:$0x1] %v2111
      %2142 = vst [vmem:[#allocation2 + $0x5e] sm:$0x1] %v2113
      %2143 = vst [vmem:[#allocation2 + $0x66] sm:$0x1] %v2096
      %2144 = vst [vmem:[#allocation2 + $0x6e] sm:$0x1] %v2110
      %2145 = vst [vmem:[#allocation2 + $0x76] sm:$0x1] %v2112
      %2146 = vst [vmem:[#allocation2 + $0x7e] sm:$0x1] %v2114
      %v2147 = vlaneseq
      %v2148 = vshrl.u32 %v2147, 7
      %v2149 = vsub.s32 7, %v2148
      %v2150 = vrot.slane %v108, %v2149
      %vm2151 = vcmp.eq.s32.totalorder %v126, %v2150
      %vm2152 = vcmp.eq.s32.totalorder %v127, %v2150
      %vm2153 = vcmp.eq.s32.totalorder %v128, %v2150
      %vm2154 = vcmp.eq.s32.totalorder %v129, %v2150
      %v2155 = vsel %vm2151, 1, 0
      %v2156 = vsel %vm2152, 1, 0
      %v2157 = vsel %vm2153, 1, 0
      %v2158 = vsel %vm2154, 1, 0
      %v2159 = vcvt.s32.f32 %v2155
      %v2160 = vcvt.s32.f32 %v2156
      %v2161 = vcvt.s32.f32 %v2157
      %v2162 = vcvt.s32.f32 %v2158
      %v2163 = vld [vmem:[#allocation6 + $0x7] sm:$0x1]
      %v2164 = vld [vmem:[#allocation6 + $0xf] sm:$0x1]
      %v2165 = vld [vmem:[#allocation6 + $0x17] sm:$0x1]
      %v2166 = vld [vmem:[#allocation6 + $0x1f] sm:$0x1]
      %v2167 = vld [vmem:[#allocation6 + $0x27] sm:$0x1]
      %v2168 = vld [vmem:[#allocation6 + $0x2f] sm:$0x1]
      %v2169 = vld [vmem:[#allocation6 + $0x37] sm:$0x1]
      %v2170 = vld [vmem:[#allocation6 + $0x3f] sm:$0x1]
      %v2171 = vld [vmem:[#allocation6 + $0x47] sm:$0x1]
      %v2172 = vld [vmem:[#allocation6 + $0x4f] sm:$0x1]
      %v2173 = vld [vmem:[#allocation6 + $0x57] sm:$0x1]
      %v2174 = vld [vmem:[#allocation6 + $0x5f] sm:$0x1]
      %v2175 = vld [vmem:[#allocation6 + $0x67] sm:$0x1]
      %v2176 = vld [vmem:[#allocation6 + $0x6f] sm:$0x1]
      %v2177 = vld [vmem:[#allocation6 + $0x77] sm:$0x1]
      %v2178 = vld [vmem:[#allocation6 + $0x7f] sm:$0x1]
      %v2195 = vrot.slane %v2164, 7
      %v2196 = vsel %vm179, %v2195, %v2163
      %v2197 = vrot.slane %v2165, 6
      %v2198 = vsel %vm182, %v2197, %v2196
      %v2199 = vrot.slane %v2166, 5
      %v2200 = vsel %vm185, %v2199, %v2198
      %v2201 = vrot.slane %v2167, 4
      %v2202 = vsel %vm188, %v2201, %v2200
      %v2203 = vrot.slane %v2168, 3
      %v2204 = vsel %vm191, %v2203, %v2202
      %v2205 = vrot.slane %v2169, 2
      %v2206 = vsel %vm194, %v2205, %v2204
      %v2207 = vrot.slane %v2170, 1
      %v2208 = vsel %vm197, %v2207, %v2206
      %v2209 = vrot.slane %v2172, 7
      %v2210 = vsel %vm179, %v2209, %v2171
      %v2211 = vrot.slane %v2173, 6
      %v2212 = vsel %vm182, %v2211, %v2210
      %v2213 = vrot.slane %v2174, 5
      %v2214 = vsel %vm185, %v2213, %v2212
      %v2215 = vrot.slane %v2175, 4
      %v2216 = vsel %vm188, %v2215, %v2214
      %v2217 = vrot.slane %v2176, 3
      %v2218 = vsel %vm191, %v2217, %v2216
      %v2219 = vrot.slane %v2177, 2
      %v2220 = vsel %vm194, %v2219, %v2218
      %v2221 = vrot.slane %v2178, 1
      %v2222 = vsel %vm197, %v2221, %v2220
      %v2223 = vsel %vm213, %v2208, 0
      %v2225 = vsel %vm213, %v2222, 0
      %2227 = vmatprep.subr.mxu0 0.0
      %2228 = vmatpush1.msra.mxu0 %v2159
      %2229 = vmatprep.subr.mxu0 0.0
      %2230 = vmatpush1.msra.mxu0 %v2160
      %2231 = vmatprep.subr.mxu0 0.0
      %2232 = vmatpush1.msra.mxu0 %v2161
      %2233 = vmatprep.subr.mxu0 0.0
      %2234 = vmatpush1.msra.mxu0 %v2162
      %2235 = vmatprep.subr.mxu0 0.0
      %2236 = vmatpush1.msra.mxu0 0.0
      %2237 = vmatprep.subr.mxu0 0.0
      %2238 = vmatpush1.msra.mxu0 0.0
      %2239 = vmatprep.subr.mxu0 0.0
      %2240 = vmatpush1.msra.mxu0 0.0
      %2241 = vmatprep.subr.mxu0 0.0
      %2242 = vmatpush1.msra.mxu0 0.0
      %2243 = vmatprep.subr.mxu0 0.0
      %2244 = vmatpush1.msra.mxu0 0.0
      %2245 = vmatprep.subr.mxu0 0.0
      %2246 = vmatpush1.msra.mxu0 0.0
      %2247 = vmatprep.subr.mxu0 0.0
      %2248 = vmatpush1.msra.mxu0 0.0
      %2249 = vmatprep.subr.mxu0 0.0
      %2250 = vmatpush1.msra.mxu0 0.0
      %2251 = vmatprep.subr.mxu0 0.0
      %2252 = vmatpush1.msra.mxu0 0.0
      %2253 = vmatprep.subr.mxu0 0.0
      %2254 = vmatpush1.msra.mxu0 0.0
      %2255 = vmatprep.subr.mxu0 0.0
      %2256 = vmatpush1.msra.mxu0 0.0
      %2257 = vmatprep.subr.mxu0 0.0
      %2258 = vmatpush1.msra.mxu0 0.0
      %2259 = vmatprep.subr.mxu0 0.0
      %2260 = vmatpush1.msra.mxu0 0.0
      %2261 = vmatprep.subr.mxu0 0.0
      %2262 = vmatpush1.msra.mxu0 0.0
      %2263 = vmatprep.subr.mxu0 0.0
      %2264 = vmatpush1.msra.mxu0 0.0
      %2265 = vmatprep.subr.mxu0 0.0
      %2266 = vmatpush1.msra.mxu0 0.0
      %2267 = vmatprep.subr.mxu0 0.0
      %2268 = vmatpush1.msra.mxu0 0.0
      %2269 = vmatprep.subr.mxu0 0.0
      %2270 = vmatpush1.msra.mxu0 0.0
      %2271 = vmatprep.subr.mxu0 0.0
      %2272 = vmatpush1.msra.mxu0 0.0
      %2273 = vmatprep.subr.mxu0 0.0
      %2274 = vmatpush1.msra.mxu0 0.0
      %2275 = vmatprep.subr.mxu0 0.0
      %2276 = vmatpush1.msra.mxu0 0.0
      %2277 = vmatprep.subr.mxu0 0.0
      %2278 = vmatpush1.msra.mxu0 0.0
      %2279 = vmatprep.subr.mxu0 0.0
      %2280 = vmatpush1.msra.mxu0 0.0
      %2281 = vmatprep.subr.mxu0 0.0
      %2282 = vmatpush1.msra.mxu0 0.0
      %2283 = vmatprep.subr.mxu0 0.0
      %2284 = vmatpush1.msra.mxu0 0.0
      %2285 = vmatprep.subr.mxu0 0.0
      %2286 = vmatpush1.msra.mxu0 0.0
      %2287 = vmatprep.subr.mxu0 0.0
      %2288 = vmatpush1.msra.mxu0 0.0
      %2289 = vmatprep.subr.mxu0 0.0
      %2290 = vmatpush1.msra.mxu0 0.0
      %2291 = vmatprep.mubr.f32.mxu0 0.0
      %2292 = vmatmul.mubr.f32.gmra.mrb[0].mxu0 %v2223
      %v2293 = vpop.f32.mrb[0].mxu0
      %v2294 = vadd.f32 0.0, %v2293
      %v2295 = vpop.f32.mrb[0].mxu0
      %2296 = vmatprep.mubr.f32.mxu0 0.0
      %2297 = vmatmul.mubr.f32.gmra.mrb[0].mxu0 %v2225
      %v2298 = vpop.f32.mrb[0].mxu0
      %v2299 = vadd.f32 0.0, %v2298
      %v2300 = vpop.f32.mrb[0].mxu0
      %2301 = vdwg.mxu0
      %v2304 = vcombine.high %v2294, %v2294
      %v2306 = vunpack.c.l.s4 1966171168
      %v2307 = vunpack.c.0.s8 %v2306
      %v2308 = vlaneseq
      %v2309 = vshrl.u32 %v2308, 7
      %v2310 = vsub.s32 %v2307, %v2309
      %v2311 = vrot.slane %v2294, %v2310
      %v2313 = vunpack.c.l.s4 1966171168
      %v2314 = vunpack.c.0.s8 %v2313
      %v2315 = vlaneseq
      %v2316 = vshrl.u32 %v2315, 7
      %v2317 = vsub.s32 %v2314, %v2316
      %v2318 = vrot.slane %v2304, %v2317
      %v2319 = vcombine.high %v2311, %v2311
      %v2320 = vcombine.high %v2318, %v2318
      %v2322 = vunpack.c.l.s4 1966171168
      %v2323 = vunpack.c.0.s8 %v2322
      %v2324 = vlaneseq
      %v2325 = vshrl.u32 %v2324, 7
      %v2326 = vsub.s32 %v2323, %v2325
      %v2327 = vrot.slane %v2311, %v2326
      %v2329 = vunpack.c.l.s4 1966171168
      %v2330 = vunpack.c.0.s8 %v2329
      %v2331 = vlaneseq
      %v2332 = vshrl.u32 %v2331, 7
      %v2333 = vsub.s32 %v2330, %v2332
      %v2334 = vrot.slane %v2318, %v2333
      %v2336 = vunpack.c.l.s4 1966171168
      %v2337 = vunpack.c.0.s8 %v2336
      %v2338 = vlaneseq
      %v2339 = vshrl.u32 %v2338, 7
      %v2340 = vsub.s32 %v2337, %v2339
      %v2341 = vrot.slane %v2319, %v2340
      %v2343 = vunpack.c.l.s4 1966171168
      %v2344 = vunpack.c.0.s8 %v2343
      %v2345 = vlaneseq
      %v2346 = vshrl.u32 %v2345, 7
      %v2347 = vsub.s32 %v2344, %v2346
      %v2348 = vrot.slane %v2320, %v2347
      %v2349 = vcombine.high %v2327, %v2327
      %v2350 = vcombine.high %v2334, %v2334
      %v2351 = vcombine.high %v2341, %v2341
      %v2352 = vcombine.high %v2348, %v2348
      %v2353 = vcombine.high %v2299, %v2299
      %v2355 = vunpack.c.l.s4 1966171168
      %v2356 = vunpack.c.0.s8 %v2355
      %v2357 = vlaneseq
      %v2358 = vshrl.u32 %v2357, 7
      %v2359 = vsub.s32 %v2356, %v2358
      %v2360 = vrot.slane %v2299, %v2359
      %v2362 = vunpack.c.l.s4 1966171168
      %v2363 = vunpack.c.0.s8 %v2362
      %v2364 = vlaneseq
      %v2365 = vshrl.u32 %v2364, 7
      %v2366 = vsub.s32 %v2363, %v2365
      %v2367 = vrot.slane %v2353, %v2366
      %v2368 = vcombine.high %v2360, %v2360
      %v2369 = vcombine.high %v2367, %v2367
      %v2371 = vunpack.c.l.s4 1966171168
      %v2372 = vunpack.c.0.s8 %v2371
      %v2373 = vlaneseq
      %v2374 = vshrl.u32 %v2373, 7
      %v2375 = vsub.s32 %v2372, %v2374
      %v2376 = vrot.slane %v2360, %v2375
      %v2378 = vunpack.c.l.s4 1966171168
      %v2379 = vunpack.c.0.s8 %v2378
      %v2380 = vlaneseq
      %v2381 = vshrl.u32 %v2380, 7
      %v2382 = vsub.s32 %v2379, %v2381
      %v2383 = vrot.slane %v2367, %v2382
      %v2385 = vunpack.c.l.s4 1966171168
      %v2386 = vunpack.c.0.s8 %v2385
      %v2387 = vlaneseq
      %v2388 = vshrl.u32 %v2387, 7
      %v2389 = vsub.s32 %v2386, %v2388
      %v2390 = vrot.slane %v2368, %v2389
      %v2392 = vunpack.c.l.s4 1966171168
      %v2393 = vunpack.c.0.s8 %v2392
      %v2394 = vlaneseq
      %v2395 = vshrl.u32 %v2394, 7
      %v2396 = vsub.s32 %v2393, %v2395
      %v2397 = vrot.slane %v2369, %v2396
      %v2398 = vcombine.high %v2376, %v2376
      %v2399 = vcombine.high %v2383, %v2383
      %v2400 = vcombine.high %v2390, %v2390
      %v2401 = vcombine.high %v2397, %v2397
      %2418 = vst [vmem:[#allocation2 + $0x7] sm:$0x1] %v2327
      %2419 = vst [vmem:[#allocation2 + $0xf] sm:$0x1] %v2341
      %2420 = vst [vmem:[#allocation2 + $0x17] sm:$0x1] %v2349
      %2421 = vst [vmem:[#allocation2 + $0x1f] sm:$0x1] %v2351
      %2422 = vst [vmem:[#allocation2 + $0x27] sm:$0x1] %v2334
      %2423 = vst [vmem:[#allocation2 + $0x2f] sm:$0x1] %v2348
      %2424 = vst [vmem:[#allocation2 + $0x37] sm:$0x1] %v2350
      %2425 = vst [vmem:[#allocation2 + $0x3f] sm:$0x1] %v2352
      %2426 = vst [vmem:[#allocation2 + $0x47] sm:$0x1] %v2376
      %2427 = vst [vmem:[#allocation2 + $0x4f] sm:$0x1] %v2390
      %2428 = vst [vmem:[#allocation2 + $0x57] sm:$0x1] %v2398
      %2429 = vst [vmem:[#allocation2 + $0x5f] sm:$0x1] %v2400
      %2430 = vst [vmem:[#allocation2 + $0x67] sm:$0x1] %v2383
      %2431 = vst [vmem:[#allocation2 + $0x6f] sm:$0x1] %v2397
      %2432 = vst [vmem:[#allocation2 + $0x77] sm:$0x1] %v2399
      %2433 = vst [vmem:[#allocation2 + $0x7f] sm:$0x1] %v2401
    $region45: #{tpu_custom_call.1} parent=1 // pred_fallthru
      _
    %p2434 = scmp.eq.s32.totalorder 0, 0
    // Predicated region
    $region46: #{tpu_custom_call.1} parent=1 // pred_check
      %p2435 = pneg %p2434
    $region47: #{tpu_custom_call.1} parent=1 // pred_check_branch
      %2437 = sbr.rel (%p2435) target = $region49
    $region48: #{tpu_custom_call.1} parent=1 // pred_region
      %vm2438 = vcmp.lt.s32.totalorder %v113, 2
      %v2439 = vld [vmem:[#allocation2] sm:$0xff]
      %v2440 = vsel %vm2438, %v2439, -1e+30
      %2441 = vst [vmem:[#allocation3] sm:$0xff] %v2440
    $region49: #{tpu_custom_call.1} parent=1 // pred_fallthru
      _
    %vm2442 = vcmp.ge.s32.totalorder %v113, 1
    %vm2443 = vcmp.ge.s32.totalorder %v113, 2
    %vm2444 = vcmp.gt.f32.partialorder %v109, 0.5
    %s2445 = scalar_select %p2434, 1, 0
    %v2446 = vld [vmem:[#allocation3] sm:$0xff]
    // While loop
    $region50: #{tpu_custom_call.1} parent=1 // loop_pre_header
      _
    $region51: #{tpu_custom_call.1} parent=1 // loop_header
      %s2448 = sphi %s2445, %s2450
      %p2449 = scmp.ge.s32.totalorder %s2448, %s120
      %v2453 = vphi %v2446, %v2489
    $region52: #{tpu_custom_call.1} parent=1 // loop_header_branch
      %2452 = sbr.rel (%p2449) target = $region56
    $region53: #{tpu_custom_call.1} parent=1 // loop_body
      %s2454 = smul.u32 %s2448, 8
      %s2455 = scalar_lea.vmem [#allocation2], %s2454
      %v2456 = vld [vmem:[%s2455] sm:$0xff]
      %2457 = vrot.lane.b32.xlu0 %v2453, 1
      %v2458 = vpop.permute.xlu0 %2457
      %v2459 = vsel %vm2442, %v2458, -1e+30
      %2460 = vrot.lane.b32.xlu0 %v2453, 2
      %v2461 = vpop.permute.xlu0 %2460
      %v2462 = vsel %vm2443, %v2461, -1e+30
      %v2463 = vsel %vm2444, %v2462, -1e+30
      %v2464 = vmax.f32 %v2453, %v2459
      %v2465 = vmax.f32 %v2464, %v2463
      %v2466 = vsub.f32 %v2453, %v2465
      %v2467 = vmul.f32 %v2466, 1.442695
      %v2468 = vpow.pop %v2467
      %v2469 = vsub.f32 %v2459, %v2465
      %v2470 = vmul.f32 %v2469, 1.442695
      %v2471 = vpow.pop %v2470
      %v2472 = vadd.f32 %v2468, %v2471
      %v2473 = vsub.f32 %v2463, %v2465
      %v2474 = vmul.f32 %v2473, 1.442695
      %v2475 = vpow.pop %v2474
      %v2476 = vadd.f32 %v2472, %v2475
      %v2477 = vlog2.pop %v2476
      %v2478 = vmul.f32 %v2477, 0.6931472
      %v2479 = vadd.f32 %v2465, %v2478
      %v2480 = vadd.f32 %v2479, %v2456
      %s2481 = sadd.s32 %s114, %s2448
      %v2482 = vstv %s2481
      %vm2483 = vcmp.lt.s32.totalorder %v2482, %v110
      %v2484 = vsel %vm2483, 1, 0
      %2485 = vset.pattern.permute.xlu0 0
      %2486 = vperm.xlu0 %2485, %v2484
      %v2487 = vpop.permute.xlu0 %2486
      %vm2488 = vcmp.eq.s32.totalorder %v2487, 1
      %v2489 = vsel %vm2488, %v2480, %v2453
    $region54: #{tpu_custom_call.1} parent=1 // loop_footer
      %s2450 = sadd.s32 %s2448, 1
    $region55: #{tpu_custom_call.1} parent=1 // loop_footer_branch
      %2447 = sbr.rel target = $region51
    $region56: #{tpu_custom_call.1} parent=1 // loop_exit
      _
    %2490 = vst [vmem:[#allocation3] sm:$0xff] %v2453
    // Predicated region
    $region57: #{tpu_custom_call.1} parent=1 // pred_check
      %p2491 = pneg %p2434
    $region58: #{tpu_custom_call.1} parent=1 // pred_check_branch
      %2493 = sbr.rel (%p2491) target = $region60
    $region59: #{tpu_custom_call.1} parent=1 // pred_region
      %v2494 = vld [vmem:[#allocation3] sm:$0xff]
      %v2495 = vmul.u32 %v111, 2
      %2496 = vset.pattern.permute.xlu0 0
      %2497 = vperm.xlu0 %2496, %v2495
      %v2498 = vpop.permute.xlu0 %2497
      %vm2499 = vcmp.eq.s32.totalorder %v113, %v2498
      %v2500 = vsel %vm2499, %v2494, -1e+30
      %2501 = vmax.xlane.f32.xlu0 %v2500
      %v2502 = vpop.xlane.xlu0 %2501
      %v2503 = vsub.s32 %v2495, 1
      %2504 = vset.pattern.permute.xlu0 0
      %2505 = vperm.xlu0 %2504, %v2503
      %v2506 = vpop.permute.xlu0 %2505
      %vm2507 = vcmp.eq.s32.totalorder %v113, %v2506
      %v2508 = vsel %vm2507, %v2494, -1e+30
      %2509 = vmax.xlane.f32.xlu0 %v2508
      %v2510 = vpop.xlane.xlu0 %2509
      %v2511 = vmax.f32 %v2502, %v2510
      %v2512 = vsub.f32 %v2502, %v2511
      %v2513 = vmul.f32 %v2512, 1.442695
      %v2514 = vpow.pop %v2513
      %v2515 = vsub.f32 %v2510, %v2511
      %v2516 = vmul.f32 %v2515, 1.442695
      %v2517 = vpow.pop %v2516
      %v2518 = vadd.f32 %v2514, %v2517
      %v2519 = vlog2.pop %v2518
      %v2520 = vmul.f32 %v2519, 0.6931472
      %v2521 = vadd.f32 %v2511, %v2520
      %v2522 = vsub.f32 0.0, %v2521
      %vm2523 = vcmp.gt.f32.partialorder %v2522, 1e+20
      %v2524 = vsel %vm2523, 0.0, %v2522
      %vm2525 = vcmp.gt.s32.totalorder %v111, 1
      %v2526 = vsel %vm2525, %v111, 1
      %v2527 = vcvt.s32.f32 %v2526
      %v2528 = vrcp.pop %v2527
      %v2529 = vmul.f32 %v2524, %v2528
      %2531 = vset.pattern.permute.xlu0 0
      %2532 = vperm.xlu0 %2531, %v2529
      %v2533 = vpop.permute.xlu0 %2532
      %v2535 = vadd.f32 %v2533, 0.0
      %2536 = vst [vmem:[#allocation15] sm:$0xff] %v2535
    $region60: #{tpu_custom_call.1} parent=1 // pred_fallthru
      _
    // Predicated region
    $region61: #{tpu_custom_call.1} parent=1 // pred_check
      _
    $region62: #{tpu_custom_call.1} parent=1 // pred_check_branch
      %2538 = sbr.rel (0) target = $region64
    $region63: #{tpu_custom_call.1} parent=1 // pred_region
      %s2540 = ssub.s32 128, 128
      %2541 = vsyncadd [#allocation8], %s2540
      %s2543 = sshll.u32 [#allocation15], 4
      %s2544 = int_to_ptr.vmem [resolvable:$true] %s2543
      %2546 = dma.vmem_to_hbm [thread:$0]  %s2544, 128, %s6, [#allocation8]
    $region64: #{tpu_custom_call.1} parent=1 // pred_fallthru
      _
    // Predicated region
    $region65: #{tpu_custom_call.1} parent=1 // pred_check
      _
    $region66: #{tpu_custom_call.1} parent=1 // pred_check_branch
      %2548 = sbr.rel (0) target = $region68
    $region67: #{tpu_custom_call.1} parent=1 // pred_region
      %2549 = dma.done [#allocation8], 128
    $region68: #{tpu_custom_call.1} parent=1 // pred_fallthru
      _
    %2550 = vsyncpa [#allocation7], 1
    %2551 = vsyncpa [#allocation10], 1
    %2552 = vsyncpa [#allocation13], 1
    %2553 = vsyncpa [#allocation8], 1

</llo_original>
